<compile_context>
chip_gen: v7x
topology: tpu7x:2x2x1
jax: 0.10.0
libtpu: 0.0.40
codegen_flags: <defaults>
</compile_context>

<pallas_src>
import jax
import jax.numpy as jnp
from jax.experimental import pallas as pl
from jax.experimental.pallas import tpu as pltpu


def _round_up(x, m):
    return (x + m - 1) // m * m


def _cdiv(a, b):
    return (a + b - 1) // b


def mlp_kernel(alpha_ref,                       # SMEM (3,) f32 PReLU slopes (scalar prefetch)
               x_ref,                           # VMEM (tile_n, in_p) f32 row tile
               w1_ref, b1_ref,                  # (in_p, out_p) bf16, (1, out_p) f32
               w2_ref, b2_ref,                  # (out_p, out_p) bf16, (1, out_p) f32
               w3_ref, b3_ref,                  # (out_p, out_p) bf16, (1, out_p) f32
               ws_ref, bs_ref,                  # (in_p, out_p) bf16, (1, out_p) f32
               o_ref):                          # VMEM (tile_n, out_p) out_dtype
    a1 = alpha_ref[0]
    a2 = alpha_ref[1]
    a3 = alpha_ref[2]

    # Stream f32 rows from HBM, cast to bf16 on the VPU (hidden under the MXU).
    xb = x_ref[...].astype(jnp.bfloat16)

    # ffn: Linear -> PReLU, three times.  f32 accumulation / activations.
    h = jnp.dot(xb, w1_ref[...], preferred_element_type=jnp.float32) + b1_ref[...]
    h = jnp.where(h >= 0, h, a1 * h)
    h = jnp.dot(h.astype(jnp.bfloat16), w2_ref[...],
                preferred_element_type=jnp.float32) + b2_ref[...]
    h = jnp.where(h >= 0, h, a2 * h)
    h = jnp.dot(h.astype(jnp.bfloat16), w3_ref[...],
                preferred_element_type=jnp.float32) + b3_ref[...]
    h = jnp.where(h >= 0, h, a3 * h)

    # Shortcut branch last: no packed-output slicing, short f32 live range.
    s = jnp.dot(xb, ws_ref[...], preferred_element_type=jnp.float32) + bs_ref[...]

    o_ref[...] = (h + s).astype(o_ref.dtype)


def _vmem_capacity_bytes():
    try:
        return int(pltpu.get_tpu_info().vmem_capacity_bytes)
    except Exception:
        return 64 * 1024 * 1024          # conservative (v7x per-TC VMEM)


def _choose_tile_n(N, tile_cap):
    """16-row granularity, >=2 tiles when possible (v7x megacore), minimal pad waste."""
    n16 = _round_up(max(N, 1), 16)
    tile = min(_round_up(tile_cap, 16), n16)
    if n16 >= 32:                        # enough rows for at least two tiles
        tile = min(tile, _round_up(_cdiv(N, 2), 16))
    grid = _cdiv(N, tile)
    tile = _round_up(_cdiv(N, grid), 16)  # re-fit so padded rows are minimal
    return tile


def _vmem_limit_bytes(tile_n, in_p, out_p, w_bufs, out_itemsize, vmem_cap):
    # Resident bf16 weights (w1, ws, w2, w3) + f32 biases (8-sublane padded blocks).
    weights = w_bufs * (2 * in_p * out_p + 2 * out_p * out_p) * 2
    biases = w_bufs * 4 * 8 * out_p * 4
    # Double-buffered f32 x tile and output tile.
    io = 2 * tile_n * in_p * 4 + 2 * tile_n * out_p * out_itemsize
    # In-kernel temporaries: bf16 x copy + a few f32 (tile_n, out_p) values.
    interm = tile_n * in_p * 2 + 3 * tile_n * out_p * 4
    est = int(1.3 * (weights + biases + io + interm))
    cap = int(0.8 * vmem_cap)
    return min(max(est, 32 * 1024 * 1024), cap)


def mlp_forward(x, params, *, tile_n=None, out_dtype=jnp.float32):
    """x: [N, in_ft] f32.  params: dict from init_params (f32 weights)."""
    N, in_ft = x.shape
    out_ft = params["w1"].shape[1]

    vmem_cap = _vmem_capacity_bytes()
    if tile_n is None:
        # 128 MiB parts (v5e/v6e) comfortably hold 2048-row tiles; 64 MiB (v7x) -> 1024.
        tile_n = 2048 if vmem_cap >= (100 << 20) else 1024

    in_p = _round_up(in_ft, 128)
    out_p = _round_up(out_ft, 128)
    tile_n = _choose_tile_n(N, tile_n)
    grid_n = _cdiv(N, tile_n)
    n_p = grid_n * tile_n

    f32, bf16 = jnp.float32, jnp.bfloat16

    def pad2(a, rows, cols):
        return jnp.pad(a, ((0, rows - a.shape[0]), (0, cols - a.shape[1])))

    # Weights bf16 (MXU inputs), biases f32.  Zero padding is inert.
    w1 = pad2(params["w1"], in_p, out_p).astype(bf16)
    ws = pad2(params["ws"], in_p, out_p).astype(bf16)
    w2 = pad2(params["w2"], out_p, out_p).astype(bf16)
    w3 = pad2(params["w3"], out_p, out_p).astype(bf16)
    b1 = pad2(params["b1"], 1, out_p).astype(f32)
    bs = pad2(params["bs"], 1, out_p).astype(f32)
    b2 = pad2(params["b2"], 1, out_p).astype(f32)
    b3 = pad2(params["b3"], 1, out_p).astype(f32)
    alphas = params["alphas"].astype(f32)          # (3,) -> SMEM

    # x streams in as f32 (no host-side bf16 pass); pad only when required.
    if n_p != N or in_p != in_ft:
        x_in = jnp.pad(x, ((0, n_p - N), (0, in_p - in_ft)))
    else:
        x_in = x

    # index_maps receive the scalar-prefetch ref as a trailing positional arg.
    row_map = lambda i, alphas_ref: (i, 0)       # pipelined row tiles
    fixed_map = lambda i, alphas_ref: (0, 0)     # weights/biases stay resident

    def run(single_buffer_weights):
        if single_buffer_weights:
            fixed = lambda shape: pl.BlockSpec(shape, fixed_map,
                                               pipeline_mode=pl.Buffered(1))
            w_bufs = 1
        else:
            fixed = lambda shape: pl.BlockSpec(shape, fixed_map)
            w_bufs = 2
        return pl.pallas_call(
            mlp_kernel,
            out_shape=jax.ShapeDtypeStruct((n_p, out_p), out_dtype),
            grid_spec=pltpu.PrefetchScalarGridSpec(
                num_scalar_prefetch=1,            # alphas -> SMEM
                grid=(grid_n,),
                in_specs=[
                    pl.BlockSpec((tile_n, in_p), row_map),   # x row tile (f32)
                    fixed((in_p, out_p)),                    # w1
                    fixed((1, out_p)),                       # b1
                    fixed((out_p, out_p)),                   # w2
                    fixed((1, out_p)),                       # b2
                    fixed((out_p, out_p)),                   # w3
                    fixed((1, out_p)),                       # b3
                    fixed((in_p, out_p)),                    # ws
                    fixed((1, out_p)),                       # bs
                ],
                out_specs=pl.BlockSpec((tile_n, out_p), row_map),
            ),
            compiler_params=pltpu.CompilerParams(
                dimension_semantics=("parallel",),
                vmem_limit_bytes=_vmem_limit_bytes(
                    tile_n, in_p, out_p, w_bufs,
                    jnp.dtype(out_dtype).itemsize, vmem_cap),
            ),
        )(alphas, x_in, w1, b1, w2, b2, w3, b3, ws, bs)

    try:
        out_padded = run(True)        # single-buffered resident weights
    except Exception:
        out_padded = run(False)       # fallback: default double-buffered weights

    if n_p != N or out_p != out_ft:
        return out_padded[:N, :out_ft]
    return out_padded


def init_params(key, in_ft, out_ft):
    """Deterministic parameter init (PyTorch Linear-style uniform bounds)."""
    ks = jax.random.split(key, 8)

    def linear(kw, kb, fan_in, fan_out):
        bound = 1.0 / jnp.sqrt(fan_in)
        w = jax.random.uniform(kw, (fan_in, fan_out), jnp.float32, -bound, bound)
        b = jax.random.uniform(kb, (1, fan_out), jnp.float32, -bound, bound)
        return w, b

    w1, b1 = linear(ks[0], ks[1], in_ft, out_ft)
    w2, b2 = linear(ks[2], ks[3], out_ft, out_ft)
    w3, b3 = linear(ks[4], ks[5], out_ft, out_ft)
    ws, bs = linear(ks[6], ks[7], in_ft, out_ft)
    alphas = jnp.full((3,), 0.25, dtype=jnp.float32)  # nn.PReLU() default init
    return dict(w1=w1, b1=b1, w2=w2, b2=b2, w3=w3, b3=b3,
                ws=ws, bs=bs, alphas=alphas)


def mlp_reference(x, p, *, bf16_matmul=False):
    """Pure-JAX reference.  bf16_matmul=True mirrors the kernel's MXU precision."""
    def mm(a, w):
        if bf16_matmul:
            a = a.astype(jnp.bfloat16)
            w = w.astype(jnp.bfloat16)
        return jnp.dot(a, w, preferred_element_type=jnp.float32)

    a1, a2, a3 = p["alphas"]
    h = mm(x, p["w1"]) + p["b1"]
    h = jnp.where(h >= 0, h, a1 * h)
    h = mm(h, p["w2"]) + p["b2"]
    h = jnp.where(h >= 0, h, a2 * h)
    h = mm(h, p["w3"]) + p["b3"]
    h = jnp.where(h >= 0, h, a3 * h)
    s = mm(x, p["ws"]) + p["bs"]
    return h + s


if __name__ == "__main__":
    key = jax.random.PRNGKey(0)
    k_x, k_p, k_x2, k_p2 = jax.random.split(key, 4)

    # Small graph-style shapes consistent with the module: N nodes x in_ft feats.
    N, in_ft, out_ft = 8, 16, 32
    x = jax.random.normal(k_x, (N, in_ft), dtype=jnp.float32)
    params = init_params(k_p, in_ft, out_ft)

    out = jax.block_until_ready(mlp_forward(x, params))
    assert out.shape == (N, out_ft)
    # Tight check vs a reference that mirrors the kernel's bf16-matmul precision.
    ref_bf16 = mlp_reference(x, params, bf16_matmul=True)
    assert jnp.allclose(out, ref_bf16, atol=3e-3, rtol=3e-3), "mismatch (bf16 ref)"
    # Looser semantic check vs the full-f32 PyTorch-equivalent forward.
    ref_f32 = mlp_reference(x, params, bf16_matmul=False)
    assert jnp.allclose(out, ref_f32, atol=5e-2, rtol=5e-2), "mismatch (f32 ref)"

    # Second shape: non-aligned dims + multi-step row grid (exercises padding,
    # the pipelined/parallel grid path and the tile-fitting logic).
    N2, in2, out2 = 600, 20, 40
    x2 = jax.random.normal(k_x2, (N2, in2), dtype=jnp.float32)
    params2 = init_params(k_p2, in2, out2)
    res2 = jax.block_until_ready(mlp_forward(x2, params2, tile_n=128))
    assert res2.shape == (N2, out2)
    ref2 = mlp_reference(x2, params2, bf16_matmul=True)
    assert jnp.allclose(res2, ref2, atol=3e-3, rtol=3e-3), "mismatch (grid case)"

    print("KERNEL_OK")
</pallas_src>

<mosaic_0001>
module attributes {stable_mosaic.version = 11 : i64} {
  func.func @mlp_kernel(%arg0: i32, %arg1: memref<3xf32, #tpu.memory_space<smem>>, %arg2: memref<16x128xf32, #tpu.memory_space<vmem>>, %arg3: memref<128x128xbf16, #tpu.memory_space<vmem>>, %arg4: memref<1x128xf32, #tpu.memory_space<vmem>>, %arg5: memref<128x128xbf16, #tpu.memory_space<vmem>>, %arg6: memref<1x128xf32, #tpu.memory_space<vmem>>, %arg7: memref<128x128xbf16, #tpu.memory_space<vmem>>, %arg8: memref<1x128xf32, #tpu.memory_space<vmem>>, %arg9: memref<128x128xbf16, #tpu.memory_space<vmem>>, %arg10: memref<1x128xf32, #tpu.memory_space<vmem>>, %arg11: memref<16x128xf32, #tpu.memory_space<vmem>>) attributes {dimension_semantics = [#tpu.dimension_semantics<parallel>], iteration_bounds = array<i64: 1>, scalar_prefetch = 1 : i64, scratch_operands = 0 : i64, tpu.core_type = #tpu.core_type<tc>, window_params = [{transform_indices = @transform_0, window_bounds = array<i64: 16, 128>}, {pipeline_mode = #tpu.pipeline_mode<synchronous>, transform_indices = @transform_1, window_bounds = array<i64: 128, 128>}, {pipeline_mode = #tpu.pipeline_mode<synchronous>, transform_indices = @transform_2, window_bounds = array<i64: 1, 128>}, {pipeline_mode = #tpu.pipeline_mode<synchronous>, transform_indices = @transform_3, window_bounds = array<i64: 128, 128>}, {pipeline_mode = #tpu.pipeline_mode<synchronous>, transform_indices = @transform_4, window_bounds = array<i64: 1, 128>}, {pipeline_mode = #tpu.pipeline_mode<synchronous>, transform_indices = @transform_5, window_bounds = array<i64: 128, 128>}, {pipeline_mode = #tpu.pipeline_mode<synchronous>, transform_indices = @transform_6, window_bounds = array<i64: 1, 128>}, {pipeline_mode = #tpu.pipeline_mode<synchronous>, transform_indices = @transform_7, window_bounds = array<i64: 128, 128>}, {pipeline_mode = #tpu.pipeline_mode<synchronous>, transform_indices = @transform_8, window_bounds = array<i64: 1, 128>}, {transform_indices = @transform_9, window_bounds = array<i64: 16, 128>}]} {
    %c0 = arith.constant 0 : index
    %0 = memref.load %arg1[%c0] : memref<3xf32, #tpu.memory_space<smem>>
    %c1 = arith.constant 1 : index
    %1 = memref.load %arg1[%c1] : memref<3xf32, #tpu.memory_space<smem>>
    %c2 = arith.constant 2 : index
    %2 = memref.load %arg1[%c2] : memref<3xf32, #tpu.memory_space<smem>>
    %c0_0 = arith.constant 0 : index
    %c0_1 = arith.constant 0 : index
    %3 = vector.load %arg2[%c0_0, %c0_1] : memref<16x128xf32, #tpu.memory_space<vmem>>, vector<16x128xf32>
    %4 = arith.truncf %3 : vector<16x128xf32> to vector<16x128xbf16>
    %c0_2 = arith.constant 0 : index
    %c0_3 = arith.constant 0 : index
    %5 = vector.load %arg3[%c0_2, %c0_3] : memref<128x128xbf16, #tpu.memory_space<vmem>>, vector<128x128xbf16>
    %cst = arith.constant dense<0.000000e+00> : vector<16x128xf32>
    %6 = tpu.matmul %4, %5, %cst {dimension_numbers = #tpu.dot_dimension_numbers<[1], [0], [0], [1], [0, 0, 1, 1], [], []>} : vector<16x128xbf16>, vector<128x128xbf16>, vector<16x128xf32> -> vector<16x128xf32>
    %c0_4 = arith.constant 0 : index
    %c0_5 = arith.constant 0 : index
    %7 = vector.load %arg4[%c0_4, %c0_5] : memref<1x128xf32, #tpu.memory_space<vmem>>, vector<1x128xf32>
    %8 = vector.broadcast %7 : vector<1x128xf32> to vector<16x128xf32>
    %9 = arith.addf %6, %8 : vector<16x128xf32>
    %cst_6 = arith.constant 0.000000e+00 : f32
    %10 = vector.broadcast %cst_6 : f32 to vector<16x128xf32>
    %11 = arith.cmpf oge, %9, %10 : vector<16x128xf32>
    %12 = vector.broadcast %0 : f32 to vector<16x128xf32>
    %13 = arith.mulf %12, %9 : vector<16x128xf32>
    %14 = arith.select %11, %9, %13 : vector<16x128xi1>, vector<16x128xf32>
    %15 = arith.truncf %14 : vector<16x128xf32> to vector<16x128xbf16>
    %c0_7 = arith.constant 0 : index
    %c0_8 = arith.constant 0 : index
    %16 = vector.load %arg5[%c0_7, %c0_8] : memref<128x128xbf16, #tpu.memory_space<vmem>>, vector<128x128xbf16>
    %cst_9 = arith.constant dense<0.000000e+00> : vector<16x128xf32>
    %17 = tpu.matmul %15, %16, %cst_9 {dimension_numbers = #tpu.dot_dimension_numbers<[1], [0], [0], [1], [0, 0, 1, 1], [], []>} : vector<16x128xbf16>, vector<128x128xbf16>, vector<16x128xf32> -> vector<16x128xf32>
    %c0_10 = arith.constant 0 : index
    %c0_11 = arith.constant 0 : index
    %18 = vector.load %arg6[%c0_10, %c0_11] : memref<1x128xf32, #tpu.memory_space<vmem>>, vector<1x128xf32>
    %19 = vector.broadcast %18 : vector<1x128xf32> to vector<16x128xf32>
    %20 = arith.addf %17, %19 : vector<16x128xf32>
    %cst_12 = arith.constant 0.000000e+00 : f32
    %21 = vector.broadcast %cst_12 : f32 to vector<16x128xf32>
    %22 = arith.cmpf oge, %20, %21 : vector<16x128xf32>
    %23 = vector.broadcast %1 : f32 to vector<16x128xf32>
    %24 = arith.mulf %23, %20 : vector<16x128xf32>
    %25 = arith.select %22, %20, %24 : vector<16x128xi1>, vector<16x128xf32>
    %26 = arith.truncf %25 : vector<16x128xf32> to vector<16x128xbf16>
    %c0_13 = arith.constant 0 : index
    %c0_14 = arith.constant 0 : index
    %27 = vector.load %arg7[%c0_13, %c0_14] : memref<128x128xbf16, #tpu.memory_space<vmem>>, vector<128x128xbf16>
    %cst_15 = arith.constant dense<0.000000e+00> : vector<16x128xf32>
    %28 = tpu.matmul %26, %27, %cst_15 {dimension_numbers = #tpu.dot_dimension_numbers<[1], [0], [0], [1], [0, 0, 1, 1], [], []>} : vector<16x128xbf16>, vector<128x128xbf16>, vector<16x128xf32> -> vector<16x128xf32>
    %c0_16 = arith.constant 0 : index
    %c0_17 = arith.constant 0 : index
    %29 = vector.load %arg8[%c0_16, %c0_17] : memref<1x128xf32, #tpu.memory_space<vmem>>, vector<1x128xf32>
    %30 = vector.broadcast %29 : vector<1x128xf32> to vector<16x128xf32>
    %31 = arith.addf %28, %30 : vector<16x128xf32>
    %cst_18 = arith.constant 0.000000e+00 : f32
    %32 = vector.broadcast %cst_18 : f32 to vector<16x128xf32>
    %33 = arith.cmpf oge, %31, %32 : vector<16x128xf32>
    %34 = vector.broadcast %2 : f32 to vector<16x128xf32>
    %35 = arith.mulf %34, %31 : vector<16x128xf32>
    %36 = arith.select %33, %31, %35 : vector<16x128xi1>, vector<16x128xf32>
    %c0_19 = arith.constant 0 : index
    %c0_20 = arith.constant 0 : index
    %37 = vector.load %arg9[%c0_19, %c0_20] : memref<128x128xbf16, #tpu.memory_space<vmem>>, vector<128x128xbf16>
    %cst_21 = arith.constant dense<0.000000e+00> : vector<16x128xf32>
    %38 = tpu.matmul %4, %37, %cst_21 {dimension_numbers = #tpu.dot_dimension_numbers<[1], [0], [0], [1], [0, 0, 1, 1], [], []>} : vector<16x128xbf16>, vector<128x128xbf16>, vector<16x128xf32> -> vector<16x128xf32>
    %c0_22 = arith.constant 0 : index
    %c0_23 = arith.constant 0 : index
    %39 = vector.load %arg10[%c0_22, %c0_23] : memref<1x128xf32, #tpu.memory_space<vmem>>, vector<1x128xf32>
    %40 = vector.broadcast %39 : vector<1x128xf32> to vector<16x128xf32>
    %41 = arith.addf %38, %40 : vector<16x128xf32>
    %42 = arith.addf %36, %41 : vector<16x128xf32>
    %c0_24 = arith.constant 0 : index
    %c0_25 = arith.constant 0 : index
    %43 = vector.load %arg11[%c0_24, %c0_25] : memref<16x128xf32, #tpu.memory_space<vmem>>, vector<16x128xf32>
    tpu.vector_store %arg11[%c0_24, %c0_25], %42 {strides = array<i32>} : memref<16x128xf32, #tpu.memory_space<vmem>>, vector<16x128xf32>,
    return
  }
  func.func @transform_0(%arg0: i32, %arg1: memref<3xf32, #tpu.memory_space<smem>>) -> (i32, i32) {
    %c0_i32 = arith.constant 0 : i32
    %c0_i32_0 = arith.constant 0 : i32
    return %arg0, %c0_i32 : i32, i32
  }
  func.func @transform_1(%arg0: i32, %arg1: memref<3xf32, #tpu.memory_space<smem>>) -> (i32, i32) {
    %c0_i32 = arith.constant 0 : i32
    %c0_i32_0 = arith.constant 0 : i32
    %c0_i32_1 = arith.constant 0 : i32
    return %c0_i32, %c0_i32_0 : i32, i32
  }
  func.func @transform_2(%arg0: i32, %arg1: memref<3xf32, #tpu.memory_space<smem>>) -> (i32, i32) {
    %c0_i32 = arith.constant 0 : i32
    %c0_i32_0 = arith.constant 0 : i32
    %c0_i32_1 = arith.constant 0 : i32
    return %c0_i32, %c0_i32_0 : i32, i32
  }
  func.func @transform_3(%arg0: i32, %arg1: memref<3xf32, #tpu.memory_space<smem>>) -> (i32, i32) {
    %c0_i32 = arith.constant 0 : i32
    %c0_i32_0 = arith.constant 0 : i32
    %c0_i32_1 = arith.constant 0 : i32
    return %c0_i32, %c0_i32_0 : i32, i32
  }
  func.func @transform_4(%arg0: i32, %arg1: memref<3xf32, #tpu.memory_space<smem>>) -> (i32, i32) {
    %c0_i32 = arith.constant 0 : i32
    %c0_i32_0 = arith.constant 0 : i32
    %c0_i32_1 = arith.constant 0 : i32
    return %c0_i32, %c0_i32_0 : i32, i32
  }
  func.func @transform_5(%arg0: i32, %arg1: memref<3xf32, #tpu.memory_space<smem>>) -> (i32, i32) {
    %c0_i32 = arith.constant 0 : i32
    %c0_i32_0 = arith.constant 0 : i32
    %c0_i32_1 = arith.constant 0 : i32
    return %c0_i32, %c0_i32_0 : i32, i32
  }
  func.func @transform_6(%arg0: i32, %arg1: memref<3xf32, #tpu.memory_space<smem>>) -> (i32, i32) {
    %c0_i32 = arith.constant 0 : i32
    %c0_i32_0 = arith.constant 0 : i32
    %c0_i32_1 = arith.constant 0 : i32
    return %c0_i32, %c0_i32_0 : i32, i32
  }
  func.func @transform_7(%arg0: i32, %arg1: memref<3xf32, #tpu.memory_space<smem>>) -> (i32, i32) {
    %c0_i32 = arith.constant 0 : i32
    %c0_i32_0 = arith.constant 0 : i32
    %c0_i32_1 = arith.constant 0 : i32
    return %c0_i32, %c0_i32_0 : i32, i32
  }
  func.func @transform_8(%arg0: i32, %arg1: memref<3xf32, #tpu.memory_space<smem>>) -> (i32, i32) {
    %c0_i32 = arith.constant 0 : i32
    %c0_i32_0 = arith.constant 0 : i32
    %c0_i32_1 = arith.constant 0 : i32
    return %c0_i32, %c0_i32_0 : i32, i32
  }
  func.func @transform_9(%arg0: i32, %arg1: memref<3xf32, #tpu.memory_space<smem>>) -> (i32, i32) {
    %c0_i32 = arith.constant 0 : i32
    %c0_i32_0 = arith.constant 0 : i32
    return %arg0, %c0_i32 : i32, i32
  }
}

module attributes {stable_mosaic.version = 11 : i64} {
  func.func @mlp_kernel(%arg0: i32, %arg1: memref<3xf32, #tpu.memory_space<smem>>, %arg2: memref<16x128xf32, #tpu.memory_space<vmem>>, %arg3: memref<128x128xbf16, #tpu.memory_space<vmem>>, %arg4: memref<1x128xf32, #tpu.memory_space<vmem>>, %arg5: memref<128x128xbf16, #tpu.memory_space<vmem>>, %arg6: memref<1x128xf32, #tpu.memory_space<vmem>>, %arg7: memref<128x128xbf16, #tpu.memory_space<vmem>>, %arg8: memref<1x128xf32, #tpu.memory_space<vmem>>, %arg9: memref<128x128xbf16, #tpu.memory_space<vmem>>, %arg10: memref<1x128xf32, #tpu.memory_space<vmem>>, %arg11: memref<16x128xf32, #tpu.memory_space<vmem>>) attributes {dimension_semantics = [#tpu.dimension_semantics<parallel>], iteration_bounds = array<i64: 1>, scalar_prefetch = 1 : i64, scratch_operands = 0 : i64, tpu.core_type = #tpu.core_type<tc>, window_params = [{transform_indices = @transform_0, window_bounds = array<i64: 16, 128>}, {pipeline_mode = #tpu.pipeline_mode<synchronous>, transform_indices = @transform_1, window_bounds = array<i64: 128, 128>}, {pipeline_mode = #tpu.pipeline_mode<synchronous>, transform_indices = @transform_2, window_bounds = array<i64: 1, 128>}, {pipeline_mode = #tpu.pipeline_mode<synchronous>, transform_indices = @transform_3, window_bounds = array<i64: 128, 128>}, {pipeline_mode = #tpu.pipeline_mode<synchronous>, transform_indices = @transform_4, window_bounds = array<i64: 1, 128>}, {pipeline_mode = #tpu.pipeline_mode<synchronous>, transform_indices = @transform_5, window_bounds = array<i64: 128, 128>}, {pipeline_mode = #tpu.pipeline_mode<synchronous>, transform_indices = @transform_6, window_bounds = array<i64: 1, 128>}, {pipeline_mode = #tpu.pipeline_mode<synchronous>, transform_indices = @transform_7, window_bounds = array<i64: 128, 128>}, {pipeline_mode = #tpu.pipeline_mode<synchronous>, transform_indices = @transform_8, window_bounds = array<i64: 1, 128>}, {transform_indices = @transform_9, window_bounds = array<i64: 16, 128>}]} {
    %c0 = arith.constant 0 : index
    %0 = memref.load %arg1[%c0] : memref<3xf32, #tpu.memory_space<smem>>
    %c1 = arith.constant 1 : index
    %1 = memref.load %arg1[%c1] : memref<3xf32, #tpu.memory_space<smem>>
    %c2 = arith.constant 2 : index
    %2 = memref.load %arg1[%c2] : memref<3xf32, #tpu.memory_space<smem>>
    %c0_0 = arith.constant 0 : index
    %c0_1 = arith.constant 0 : index
    %3 = vector.load %arg2[%c0_0, %c0_1] : memref<16x128xf32, #tpu.memory_space<vmem>>, vector<16x128xf32>
    %4 = arith.truncf %3 : vector<16x128xf32> to vector<16x128xbf16>
    %c0_2 = arith.constant 0 : index
    %c0_3 = arith.constant 0 : index
    %5 = vector.load %arg3[%c0_2, %c0_3] : memref<128x128xbf16, #tpu.memory_space<vmem>>, vector<128x128xbf16>
    %cst = arith.constant dense<0.000000e+00> : vector<16x128xf32>
    %6 = tpu.matmul %4, %5, %cst {dimension_numbers = #tpu.dot_dimension_numbers<[1], [0], [0], [1], [0, 0, 1, 1], [], []>} : vector<16x128xbf16>, vector<128x128xbf16>, vector<16x128xf32> -> vector<16x128xf32>
    %c0_4 = arith.constant 0 : index
    %c0_5 = arith.constant 0 : index
    %7 = vector.load %arg4[%c0_4, %c0_5] : memref<1x128xf32, #tpu.memory_space<vmem>>, vector<1x128xf32>
    %8 = vector.broadcast %7 : vector<1x128xf32> to vector<16x128xf32>
    %9 = arith.addf %6, %8 : vector<16x128xf32>
    %cst_6 = arith.constant 0.000000e+00 : f32
    %10 = vector.broadcast %cst_6 : f32 to vector<16x128xf32>
    %11 = arith.cmpf oge, %9, %10 : vector<16x128xf32>
    %12 = vector.broadcast %0 : f32 to vector<16x128xf32>
    %13 = arith.mulf %12, %9 : vector<16x128xf32>
    %14 = arith.select %11, %9, %13 : vector<16x128xi1>, vector<16x128xf32>
    %15 = arith.truncf %14 : vector<16x128xf32> to vector<16x128xbf16>
    %c0_7 = arith.constant 0 : index
    %c0_8 = arith.constant 0 : index
    %16 = vector.load %arg5[%c0_7, %c0_8] : memref<128x128xbf16, #tpu.memory_space<vmem>>, vector<128x128xbf16>
    %cst_9 = arith.constant dense<0.000000e+00> : vector<16x128xf32>
    %17 = tpu.matmul %15, %16, %cst_9 {dimension_numbers = #tpu.dot_dimension_numbers<[1], [0], [0], [1], [0, 0, 1, 1], [], []>} : vector<16x128xbf16>, vector<128x128xbf16>, vector<16x128xf32> -> vector<16x128xf32>
    %c0_10 = arith.constant 0 : index
    %c0_11 = arith.constant 0 : index
    %18 = vector.load %arg6[%c0_10, %c0_11] : memref<1x128xf32, #tpu.memory_space<vmem>>, vector<1x128xf32>
    %19 = vector.broadcast %18 : vector<1x128xf32> to vector<16x128xf32>
    %20 = arith.addf %17, %19 : vector<16x128xf32>
    %cst_12 = arith.constant 0.000000e+00 : f32
    %21 = vector.broadcast %cst_12 : f32 to vector<16x128xf32>
    %22 = arith.cmpf oge, %20, %21 : vector<16x128xf32>
    %23 = vector.broadcast %1 : f32 to vector<16x128xf32>
    %24 = arith.mulf %23, %20 : vector<16x128xf32>
    %25 = arith.select %22, %20, %24 : vector<16x128xi1>, vector<16x128xf32>
    %26 = arith.truncf %25 : vector<16x128xf32> to vector<16x128xbf16>
    %c0_13 = arith.constant 0 : index
    %c0_14 = arith.constant 0 : index
    %27 = vector.load %arg7[%c0_13, %c0_14] : memref<128x128xbf16, #tpu.memory_space<vmem>>, vector<128x128xbf16>
    %cst_15 = arith.constant dense<0.000000e+00> : vector<16x128xf32>
    %28 = tpu.matmul %26, %27, %cst_15 {dimension_numbers = #tpu.dot_dimension_numbers<[1], [0], [0], [1], [0, 0, 1, 1], [], []>} : vector<16x128xbf16>, vector<128x128xbf16>, vector<16x128xf32> -> vector<16x128xf32>
    %c0_16 = arith.constant 0 : index
    %c0_17 = arith.constant 0 : index
    %29 = vector.load %arg8[%c0_16, %c0_17] : memref<1x128xf32, #tpu.memory_space<vmem>>, vector<1x128xf32>
    %30 = vector.broadcast %29 : vector<1x128xf32> to vector<16x128xf32>
    %31 = arith.addf %28, %30 : vector<16x128xf32>
    %cst_18 = arith.constant 0.000000e+00 : f32
    %32 = vector.broadcast %cst_18 : f32 to vector<16x128xf32>
    %33 = arith.cmpf oge, %31, %32 : vector<16x128xf32>
    %34 = vector.broadcast %2 : f32 to vector<16x128xf32>
    %35 = arith.mulf %34, %31 : vector<16x128xf32>
    %36 = arith.select %33, %31, %35 : vector<16x128xi1>, vector<16x128xf32>
    %c0_19 = arith.constant 0 : index
    %c0_20 = arith.constant 0 : index
    %37 = vector.load %arg9[%c0_19, %c0_20] : memref<128x128xbf16, #tpu.memory_space<vmem>>, vector<128x128xbf16>
    %cst_21 = arith.constant dense<0.000000e+00> : vector<16x128xf32>
    %38 = tpu.matmul %4, %37, %cst_21 {dimension_numbers = #tpu.dot_dimension_numbers<[1], [0], [0], [1], [0, 0, 1, 1], [], []>} : vector<16x128xbf16>, vector<128x128xbf16>, vector<16x128xf32> -> vector<16x128xf32>
    %c0_22 = arith.constant 0 : index
    %c0_23 = arith.constant 0 : index
    %39 = vector.load %arg10[%c0_22, %c0_23] : memref<1x128xf32, #tpu.memory_space<vmem>>, vector<1x128xf32>
    %40 = vector.broadcast %39 : vector<1x128xf32> to vector<16x128xf32>
    %41 = arith.addf %38, %40 : vector<16x128xf32>
    %42 = arith.addf %36, %41 : vector<16x128xf32>
    %c0_24 = arith.constant 0 : index
    %c0_25 = arith.constant 0 : index
    %43 = vector.load %arg11[%c0_24, %c0_25] : memref<16x128xf32, #tpu.memory_space<vmem>>, vector<16x128xf32>
    tpu.vector_store %arg11[%c0_24, %c0_25], %42 {strides = array<i32>} : memref<16x128xf32, #tpu.memory_space<vmem>>, vector<16x128xf32>,
    return
  }
  func.func @transform_0(%arg0: i32, %arg1: memref<3xf32, #tpu.memory_space<smem>>) -> (i32, i32) {
    %c0_i32 = arith.constant 0 : i32
    %c0_i32_0 = arith.constant 0 : i32
    return %arg0, %c0_i32 : i32, i32
  }
  func.func @transform_1(%arg0: i32, %arg1: memref<3xf32, #tpu.memory_space<smem>>) -> (i32, i32) {
    %c0_i32 = arith.constant 0 : i32
    %c0_i32_0 = arith.constant 0 : i32
    %c0_i32_1 = arith.constant 0 : i32
    return %c0_i32, %c0_i32_0 : i32, i32
  }
  func.func @transform_2(%arg0: i32, %arg1: memref<3xf32, #tpu.memory_space<smem>>) -> (i32, i32) {
    %c0_i32 = arith.constant 0 : i32
    %c0_i32_0 = arith.constant 0 : i32
    %c0_i32_1 = arith.constant 0 : i32
    return %c0_i32, %c0_i32_0 : i32, i32
  }
  func.func @transform_3(%arg0: i32, %arg1: memref<3xf32, #tpu.memory_space<smem>>) -> (i32, i32) {
    %c0_i32 = arith.constant 0 : i32
    %c0_i32_0 = arith.constant 0 : i32
    %c0_i32_1 = arith.constant 0 : i32
    return %c0_i32, %c0_i32_0 : i32, i32
  }
  func.func @transform_4(%arg0: i32, %arg1: memref<3xf32, #tpu.memory_space<smem>>) -> (i32, i32) {
    %c0_i32 = arith.constant 0 : i32
    %c0_i32_0 = arith.constant 0 : i32
    %c0_i32_1 = arith.constant 0 : i32
    return %c0_i32, %c0_i32_0 : i32, i32
  }
  func.func @transform_5(%arg0: i32, %arg1: memref<3xf32, #tpu.memory_space<smem>>) -> (i32, i32) {
    %c0_i32 = arith.constant 0 : i32
    %c0_i32_0 = arith.constant 0 : i32
    %c0_i32_1 = arith.constant 0 : i32
    return %c0_i32, %c0_i32_0 : i32, i32
  }
  func.func @transform_6(%arg0: i32, %arg1: memref<3xf32, #tpu.memory_space<smem>>) -> (i32, i32) {
    %c0_i32 = arith.constant 0 : i32
    %c0_i32_0 = arith.constant 0 : i32
    %c0_i32_1 = arith.constant 0 : i32
    return %c0_i32, %c0_i32_0 : i32, i32
  }
  func.func @transform_7(%arg0: i32, %arg1: memref<3xf32, #tpu.memory_space<smem>>) -> (i32, i32) {
    %c0_i32 = arith.constant 0 : i32
    %c0_i32_0 = arith.constant 0 : i32
    %c0_i32_1 = arith.constant 0 : i32
    return %c0_i32, %c0_i32_0 : i32, i32
  }
  func.func @transform_8(%arg0: i32, %arg1: memref<3xf32, #tpu.memory_space<smem>>) -> (i32, i32) {
    %c0_i32 = arith.constant 0 : i32
    %c0_i32_0 = arith.constant 0 : i32
    %c0_i32_1 = arith.constant 0 : i32
    return %c0_i32, %c0_i32_0 : i32, i32
  }
  func.func @transform_9(%arg0: i32, %arg1: memref<3xf32, #tpu.memory_space<smem>>) -> (i32, i32) {
    %c0_i32 = arith.constant 0 : i32
    %c0_i32_0 = arith.constant 0 : i32
    return %arg0, %c0_i32 : i32, i32
  }
}

</mosaic_0001>

<llo_original>
// kernel: tpu_custom_call.1
$region0: #{tpu_custom_call.1}
  #allocation0 [shape = 'u32[]', space=smem, size = 0x4, offset = 0x4, fixed_abs, tag = 'smem constant byte address 0x4 - core index']
  #allocation1 [shape = 'u32[144,128]{1,0:T(1,128)}', space=vmem, size = 0x12000, scoped, tag = 'internal scratch']
  #allocation2 [shape = 's32[1]{0}', space=sflag, size = 0x4, scoped, tag = 'scoped memory for tpu_custom_call.1']
  #allocation3 [shape = 'u8[512]{0}', space=smem, size = 0x200, scoped, tag = 'prefetched SMEM operand 0']
  %s0 = inlined_call_operand.hbm [shape: f32[3], index: 0, kind: input, shape index: {}]
  %s1 = inlined_call_operand.hbm [shape: f32[16,128], index: 1, kind: input, shape index: {}]
  %s2 = inlined_call_operand.hbm [shape: bf16[128,128], index: 2, kind: input, shape index: {}]
  %s3 = inlined_call_operand.vmem [shape: f32[1,128], index: 3, kind: input, shape index: {}]
  %s4 = inlined_call_operand.hbm [shape: bf16[128,128], index: 4, kind: input, shape index: {}]
  %s5 = inlined_call_operand.vmem [shape: f32[1,128], index: 5, kind: input, shape index: {}]
  %s6 = inlined_call_operand.hbm [shape: bf16[128,128], index: 6, kind: input, shape index: {}]
  %s7 = inlined_call_operand.vmem [shape: f32[1,128], index: 7, kind: input, shape index: {}]
  %s8 = inlined_call_operand.hbm [shape: bf16[128,128], index: 8, kind: input, shape index: {}]
  %s9 = inlined_call_operand.vmem [shape: f32[1,128], index: 9, kind: input, shape index: {}]
  %s10 = inlined_call_operand.hbm [shape: f32[16,128], index: 10, kind: output, shape index: {}]
  %s11 = sld [smem:[#allocation0]]
  $region66: #{tpu_custom_call.1} parent=0
    _
  %s13 = ssub.s32 1, %s11
  %s14 = scalar_select 0, %s13, %s11
  %16 = dma.hbm_to_smem %s0, 16, [#allocation3], [#allocation2]
  %17 = dma.done [#allocation2], 16
  %18 = sfence
  $region1: #{tpu_custom_call.1} parent=0
    #allocation4 [shape = 'u8[8192]{0}', space=vmem, size = 0x2000, scoped, tag = 'input window, operand 1, single buffered']
    #allocation5 [shape = 's32[1]{0}', space=sflag, size = 0x4, scoped, tag = 'scoped memory for tpu_custom_call.1']
    #allocation6 [shape = 's32[1]{0}', space=sflag, size = 0x4, scoped, tag = 'scoped memory for tpu_custom_call.1']
    #allocation7 [shape = 'u8[32768]{0}', space=vmem, size = 0x8000, scoped, tag = 'input window, operand 2, single buffered']
    #allocation8 [shape = 's32[1]{0}', space=sflag, size = 0x4, scoped, tag = 'scoped memory for tpu_custom_call.1']
    #allocation9 [shape = 'u8[32768]{0}', space=vmem, size = 0x8000, scoped, tag = 'input window, operand 4, single buffered']
    #allocation10 [shape = 'u8[32768]{0}', space=vmem, size = 0x8000, scoped, tag = 'input window, operand 6, single buffered']
    #allocation11 [shape = 's32[1]{0}', space=sflag, size = 0x4, scoped, tag = 'scoped memory for tpu_custom_call.1']
    #allocation12 [shape = 'u8[32768]{0}', space=vmem, size = 0x8000, scoped, tag = 'input window, operand 8, single buffered']
    #allocation13 [shape = 'u8[8192]{0}', space=vmem, size = 0x2000, scoped, tag = 'output window, operand 0, single buffered']
    %19 = vsyncpa [#allocation5], 0
    %20 = vsyncpa [#allocation8], 0
    %21 = vsyncpa [#allocation11], 0
    %22 = vsyncpa [#allocation6], 0
    // Predicated region
    $region2: #{tpu_custom_call.1} parent=1 // pred_check
      _
    $region3: #{tpu_custom_call.1} parent=1 // pred_check_branch
      %24 = sbr.rel (0) target = $region5
    $region4: #{tpu_custom_call.1} parent=1 // pred_region
      %s26 = ssub.s32 256, 256
      %27 = vsyncadd [#allocation5], %s26
      %s28 = sshll.u32 [#allocation4], 4
      %s29 = int_to_ptr.vmem [resolvable:$true] %s28
      %34 = dma.hbm_to_vmem [thread:$0]  %s1, 256, %s29, [#allocation5], 128, 128, 8
    $region5: #{tpu_custom_call.1} parent=1 // pred_fallthru
      _
    // Predicated region
    $region6: #{tpu_custom_call.1} parent=1 // pred_check
      _
    $region7: #{tpu_custom_call.1} parent=1 // pred_check_branch
      %36 = sbr.rel (0) target = $region9
    $region8: #{tpu_custom_call.1} parent=1 // pred_region
      %s38 = ssub.s32 1024, 1024
      %39 = vsyncadd [#allocation8], %s38
      %s40 = sshll.u32 [#allocation7], 4
      %s41 = int_to_ptr.vmem [resolvable:$true] %s40
      %46 = dma.hbm_to_vmem [thread:$0]  %s2, 1024, %s41, [#allocation8], 64, 64, 4
    $region9: #{tpu_custom_call.1} parent=1 // pred_fallthru
      _
    // Predicated region
    $region10: #{tpu_custom_call.1} parent=1 // pred_check
      _
    $region11: #{tpu_custom_call.1} parent=1 // pred_check_branch
      %48 = sbr.rel (0) target = $region13
    $region12: #{tpu_custom_call.1} parent=1 // pred_region
      _
    $region13: #{tpu_custom_call.1} parent=1 // pred_fallthru
      _
    // Predicated region
    $region14: #{tpu_custom_call.1} parent=1 // pred_check
      _
    $region15: #{tpu_custom_call.1} parent=1 // pred_check_branch
      %50 = sbr.rel (0) target = $region17
    $region16: #{tpu_custom_call.1} parent=1 // pred_region
      %s52 = ssub.s32 1024, 1024
      %53 = vsyncadd [#allocation8], %s52
      %s54 = sshll.u32 [#allocation9], 4
      %s55 = int_to_ptr.vmem [resolvable:$true] %s54
      %60 = dma.hbm_to_vmem [thread:$0]  %s4, 1024, %s55, [#allocation8], 64, 64, 4
    $region17: #{tpu_custom_call.1} parent=1 // pred_fallthru
      _
    // Predicated region
    $region18: #{tpu_custom_call.1} parent=1 // pred_check
      _
    $region19: #{tpu_custom_call.1} parent=1 // pred_check_branch
      %62 = sbr.rel (0) target = $region21
    $region20: #{tpu_custom_call.1} parent=1 // pred_region
      _
    $region21: #{tpu_custom_call.1} parent=1 // pred_fallthru
      _
    // Predicated region
    $region22: #{tpu_custom_call.1} parent=1 // pred_check
      _
    $region23: #{tpu_custom_call.1} parent=1 // pred_check_branch
      %64 = sbr.rel (0) target = $region25
    $region24: #{tpu_custom_call.1} parent=1 // pred_region
      %s66 = ssub.s32 1024, 1024
      %67 = vsyncadd [#allocation11], %s66
      %s68 = sshll.u32 [#allocation10], 4
      %s69 = int_to_ptr.vmem [resolvable:$true] %s68
      %74 = dma.hbm_to_vmem [thread:$0]  %s6, 1024, %s69, [#allocation11], 64, 64, 4
    $region25: #{tpu_custom_call.1} parent=1 // pred_fallthru
      _
    // Predicated region
    $region26: #{tpu_custom_call.1} parent=1 // pred_check
      _
    $region27: #{tpu_custom_call.1} parent=1 // pred_check_branch
      %76 = sbr.rel (0) target = $region29
    $region28: #{tpu_custom_call.1} parent=1 // pred_region
      _
    $region29: #{tpu_custom_call.1} parent=1 // pred_fallthru
      _
    // Predicated region
    $region30: #{tpu_custom_call.1} parent=1 // pred_check
      _
    $region31: #{tpu_custom_call.1} parent=1 // pred_check_branch
      %78 = sbr.rel (0) target = $region33
    $region32: #{tpu_custom_call.1} parent=1 // pred_region
      %s80 = ssub.s32 1024, 1024
      %81 = vsyncadd [#allocation11], %s80
      %s82 = sshll.u32 [#allocation12], 4
      %s83 = int_to_ptr.vmem [resolvable:$true] %s82
      %88 = dma.hbm_to_vmem [thread:$0]  %s8, 1024, %s83, [#allocation11], 64, 64, 4
    $region33: #{tpu_custom_call.1} parent=1 // pred_fallthru
      _
    // Predicated region
    $region34: #{tpu_custom_call.1} parent=1 // pred_check
      _
    $region35: #{tpu_custom_call.1} parent=1 // pred_check_branch
      %90 = sbr.rel (0) target = $region37
    $region36: #{tpu_custom_call.1} parent=1 // pred_region
      _
    $region37: #{tpu_custom_call.1} parent=1 // pred_fallthru
      _
    // Predicated region
    $region38: #{tpu_custom_call.1} parent=1 // pred_check
      _
    $region39: #{tpu_custom_call.1} parent=1 // pred_check_branch
      %92 = sbr.rel (0) target = $region41
    $region40: #{tpu_custom_call.1} parent=1 // pred_region
      %93 = dma.done [#allocation5], 256
    $region41: #{tpu_custom_call.1} parent=1 // pred_fallthru
      _
    // Predicated region
    $region42: #{tpu_custom_call.1} parent=1 // pred_check
      _
    $region43: #{tpu_custom_call.1} parent=1 // pred_check_branch
      %95 = sbr.rel (0) target = $region45
    $region44: #{tpu_custom_call.1} parent=1 // pred_region
      %96 = dma.done [#allocation8], 1024
    $region45: #{tpu_custom_call.1} parent=1 // pred_fallthru
      _
    // Predicated region
    $region46: #{tpu_custom_call.1} parent=1 // pred_check
      _
    $region47: #{tpu_custom_call.1} parent=1 // pred_check_branch
      %98 = sbr.rel (0) target = $region49
    $region48: #{tpu_custom_call.1} parent=1 // pred_region
      %99 = dma.done [#allocation8], 1024
    $region49: #{tpu_custom_call.1} parent=1 // pred_fallthru
      _
    // Predicated region
    $region50: #{tpu_custom_call.1} parent=1 // pred_check
      _
    $region51: #{tpu_custom_call.1} parent=1 // pred_check_branch
      %101 = sbr.rel (0) target = $region53
    $region52: #{tpu_custom_call.1} parent=1 // pred_region
      %102 = dma.done [#allocation11], 1024
    $region53: #{tpu_custom_call.1} parent=1 // pred_fallthru
      _
    // Predicated region
    $region54: #{tpu_custom_call.1} parent=1 // pred_check
      _
    $region55: #{tpu_custom_call.1} parent=1 // pred_check_branch
      %104 = sbr.rel (0) target = $region57
    $region56: #{tpu_custom_call.1} parent=1 // pred_region
      %105 = dma.done [#allocation11], 1024
    $region57: #{tpu_custom_call.1} parent=1 // pred_fallthru
      _
    %s107 = sld [smem:[#allocation3]]
    %s108 = sld [smem:[#allocation3 + $0x1]]
    %s109 = sld [smem:[#allocation3 + $0x2]]
    %v110 = vld [vmem:[#allocation4] sm:$0xff]
    %v111 = vld [vmem:[#allocation4 + $0x8] sm:$0xff]
    %v112 = vpack.c.bf16 %v111, %v110
    %v113 = vld [vmem:[#allocation7] sm:$0xf]
    %v114 = vld [vmem:[#allocation7 + $0x4] sm:$0xf]
    %v115 = vld [vmem:[#allocation7 + $0x8] sm:$0xf]
    %v116 = vld [vmem:[#allocation7 + $0xc] sm:$0xf]
    %v117 = vld [vmem:[#allocation7 + $0x10] sm:$0xf]
    %v118 = vld [vmem:[#allocation7 + $0x14] sm:$0xf]
    %v119 = vld [vmem:[#allocation7 + $0x18] sm:$0xf]
    %v120 = vld [vmem:[#allocation7 + $0x1c] sm:$0xf]
    %v121 = vld [vmem:[#allocation7 + $0x20] sm:$0xf]
    %v122 = vld [vmem:[#allocation7 + $0x24] sm:$0xf]
    %v123 = vld [vmem:[#allocation7 + $0x28] sm:$0xf]
    %v124 = vld [vmem:[#allocation7 + $0x2c] sm:$0xf]
    %v125 = vld [vmem:[#allocation7 + $0x30] sm:$0xf]
    %v126 = vld [vmem:[#allocation7 + $0x34] sm:$0xf]
    %v127 = vld [vmem:[#allocation7 + $0x38] sm:$0xf]
    %v128 = vld [vmem:[#allocation7 + $0x3c] sm:$0xf]
    %v129 = vld [vmem:[%s3] sm:$0x1]
    %v131 = vlaneseq
    %v132 = vshrl.u32 %v131, 7
    %v133 = vsub.s32 0, %v132
    %v134 = vrot.slane %v129, %v133
    %v152 = vunpack.c.l.b16 %v113
    %v153 = vunpack.c.l.b16 %v114
    %v154 = vunpack.c.l.b16 %v115
    %v155 = vunpack.c.l.b16 %v116
    %v156 = vunpack.c.l.b16 %v117
    %v157 = vunpack.c.l.b16 %v118
    %v158 = vunpack.c.l.b16 %v119
    %v159 = vunpack.c.l.b16 %v120
    %v160 = vunpack.c.l.b16 %v121
    %v161 = vunpack.c.l.b16 %v122
    %v162 = vunpack.c.l.b16 %v123
    %v163 = vunpack.c.l.b16 %v124
    %v164 = vunpack.c.l.b16 %v125
    %v165 = vunpack.c.l.b16 %v126
    %v166 = vunpack.c.l.b16 %v127
    %v167 = vunpack.c.l.b16 %v128
    %v168 = vpack.c.b16 %v153, %v152
    %v169 = vpack.c.b16 %v155, %v154
    %v170 = vpack.c.b16 %v157, %v156
    %v171 = vpack.c.b16 %v159, %v158
    %v172 = vpack.c.b16 %v161, %v160
    %v173 = vpack.c.b16 %v163, %v162
    %v174 = vpack.c.b16 %v165, %v164
    %v175 = vpack.c.b16 %v167, %v166
    %184 = vmatprep.subr.bf16.mxu0 0
    %185 = vmatpush1.bf16.msra.mxu0 %v168
    %186 = vmatprep.subr.bf16.mxu0 0
    %187 = vmatpush1.bf16.msra.mxu0 %v169
    %188 = vmatprep.subr.bf16.mxu0 0
    %189 = vmatpush1.bf16.msra.mxu0 %v170
    %190 = vmatprep.subr.bf16.mxu0 0
    %191 = vmatpush1.bf16.msra.mxu0 %v171
    %192 = vmatprep.subr.bf16.mxu0 0
    %193 = vmatpush1.bf16.msra.mxu0 %v172
    %194 = vmatprep.subr.bf16.mxu0 0
    %195 = vmatpush1.bf16.msra.mxu0 %v173
    %196 = vmatprep.subr.bf16.mxu0 0
    %197 = vmatpush1.bf16.msra.mxu0 %v174
    %198 = vmatprep.subr.bf16.mxu0 0
    %199 = vmatpush1.bf16.msra.mxu0 %v175
    %200 = vmatprep.subr.bf16.mxu0 0
    %201 = vmatpush1.bf16.msra.mxu0 0
    %202 = vmatprep.subr.bf16.mxu0 0
    %203 = vmatpush1.bf16.msra.mxu0 0
    %204 = vmatprep.subr.bf16.mxu0 0
    %205 = vmatpush1.bf16.msra.mxu0 0
    %206 = vmatprep.subr.bf16.mxu0 0
    %207 = vmatpush1.bf16.msra.mxu0 0
    %208 = vmatprep.subr.bf16.mxu0 0
    %209 = vmatpush1.bf16.msra.mxu0 0
    %210 = vmatprep.subr.bf16.mxu0 0
    %211 = vmatpush1.bf16.msra.mxu0 0
    %212 = vmatprep.subr.bf16.mxu0 0
    %213 = vmatpush1.bf16.msra.mxu0 0
    %214 = vmatprep.subr.bf16.mxu0 0
    %215 = vmatpush1.bf16.msra.mxu0 0
    %216 = vmatprep.mubr.bf16.mxu0 0
    %217 = vmatmul.mubr.bf16.gmra.mrb[0].mxu0 %v112
    %v218 = vpop.f32.mrb[0].mxu0
    %v219 = vadd.f32 %v134, %v218
    %v220 = vpop.f32.mrb[0].mxu0
    %v221 = vpop.f32.mrb[0].mxu0
    %v222 = vadd.f32 %v134, %v221
    %v223 = vpop.f32.mrb[0].mxu0
    %224 = vdwg.mxu0
    %vm225 = vcmp.ge.f32.partialorder %v219, 0.0
    %vm226 = vcmp.ge.f32.partialorder %v222, 0.0
    %v227 = vstv %s107
    %v228 = vmul.f32 %v227, %v219
    %v229 = vmul.f32 %v227, %v222
    %v230 = vsel %vm225, %v219, %v228
    %v231 = vsel %vm226, %v222, %v229
    %v232 = vpack.c.bf16 %v231, %v230
    %v233 = vld [vmem:[#allocation9] sm:$0xf]
    %v234 = vld [vmem:[#allocation9 + $0x4] sm:$0xf]
    %v235 = vld [vmem:[#allocation9 + $0x8] sm:$0xf]
    %v236 = vld [vmem:[#allocation9 + $0xc] sm:$0xf]
    %v237 = vld [vmem:[#allocation9 + $0x10] sm:$0xf]
    %v238 = vld [vmem:[#allocation9 + $0x14] sm:$0xf]
    %v239 = vld [vmem:[#allocation9 + $0x18] sm:$0xf]
    %v240 = vld [vmem:[#allocation9 + $0x1c] sm:$0xf]
    %v241 = vld [vmem:[#allocation9 + $0x20] sm:$0xf]
    %v242 = vld [vmem:[#allocation9 + $0x24] sm:$0xf]
    %v243 = vld [vmem:[#allocation9 + $0x28] sm:$0xf]
    %v244 = vld [vmem:[#allocation9 + $0x2c] sm:$0xf]
    %v245 = vld [vmem:[#allocation9 + $0x30] sm:$0xf]
    %v246 = vld [vmem:[#allocation9 + $0x34] sm:$0xf]
    %v247 = vld [vmem:[#allocation9 + $0x38] sm:$0xf]
    %v248 = vld [vmem:[#allocation9 + $0x3c] sm:$0xf]
    %v249 = vld [vmem:[%s5] sm:$0x1]
    %v251 = vlaneseq
    %v252 = vshrl.u32 %v251, 7
    %v253 = vsub.s32 0, %v252
    %v254 = vrot.slane %v249, %v253
    %v272 = vunpack.c.l.b16 %v233
    %v273 = vunpack.c.l.b16 %v234
    %v274 = vunpack.c.l.b16 %v235
    %v275 = vunpack.c.l.b16 %v236
    %v276 = vunpack.c.l.b16 %v237
    %v277 = vunpack.c.l.b16 %v238
    %v278 = vunpack.c.l.b16 %v239
    %v279 = vunpack.c.l.b16 %v240
    %v280 = vunpack.c.l.b16 %v241
    %v281 = vunpack.c.l.b16 %v242
    %v282 = vunpack.c.l.b16 %v243
    %v283 = vunpack.c.l.b16 %v244
    %v284 = vunpack.c.l.b16 %v245
    %v285 = vunpack.c.l.b16 %v246
    %v286 = vunpack.c.l.b16 %v247
    %v287 = vunpack.c.l.b16 %v248
    %v288 = vpack.c.b16 %v273, %v272
    %v289 = vpack.c.b16 %v275, %v274
    %v290 = vpack.c.b16 %v277, %v276
    %v291 = vpack.c.b16 %v279, %v278
    %v292 = vpack.c.b16 %v281, %v280
    %v293 = vpack.c.b16 %v283, %v282
    %v294 = vpack.c.b16 %v285, %v284
    %v295 = vpack.c.b16 %v287, %v286
    %304 = vmatprep.subr.bf16.mxu0 0
    %305 = vmatpush1.bf16.msra.mxu0 %v288
    %306 = vmatprep.subr.bf16.mxu0 0
    %307 = vmatpush1.bf16.msra.mxu0 %v289
    %308 = vmatprep.subr.bf16.mxu0 0
    %309 = vmatpush1.bf16.msra.mxu0 %v290
    %310 = vmatprep.subr.bf16.mxu0 0
    %311 = vmatpush1.bf16.msra.mxu0 %v291
    %312 = vmatprep.subr.bf16.mxu0 0
    %313 = vmatpush1.bf16.msra.mxu0 %v292
    %314 = vmatprep.subr.bf16.mxu0 0
    %315 = vmatpush1.bf16.msra.mxu0 %v293
    %316 = vmatprep.subr.bf16.mxu0 0
    %317 = vmatpush1.bf16.msra.mxu0 %v294
    %318 = vmatprep.subr.bf16.mxu0 0
    %319 = vmatpush1.bf16.msra.mxu0 %v295
    %320 = vmatprep.subr.bf16.mxu0 0
    %321 = vmatpush1.bf16.msra.mxu0 0
    %322 = vmatprep.subr.bf16.mxu0 0
    %323 = vmatpush1.bf16.msra.mxu0 0
    %324 = vmatprep.subr.bf16.mxu0 0
    %325 = vmatpush1.bf16.msra.mxu0 0
    %326 = vmatprep.subr.bf16.mxu0 0
    %327 = vmatpush1.bf16.msra.mxu0 0
    %328 = vmatprep.subr.bf16.mxu0 0
    %329 = vmatpush1.bf16.msra.mxu0 0
    %330 = vmatprep.subr.bf16.mxu0 0
    %331 = vmatpush1.bf16.msra.mxu0 0
    %332 = vmatprep.subr.bf16.mxu0 0
    %333 = vmatpush1.bf16.msra.mxu0 0
    %334 = vmatprep.subr.bf16.mxu0 0
    %335 = vmatpush1.bf16.msra.mxu0 0
    %336 = vmatprep.mubr.bf16.mxu0 0
    %337 = vmatmul.mubr.bf16.gmra.mrb[0].mxu0 %v232
    %v338 = vpop.f32.mrb[0].mxu0
    %v339 = vadd.f32 %v254, %v338
    %v340 = vpop.f32.mrb[0].mxu0
    %v341 = vpop.f32.mrb[0].mxu0
    %v342 = vadd.f32 %v254, %v341
    %v343 = vpop.f32.mrb[0].mxu0
    %344 = vdwg.mxu0
    %vm345 = vcmp.ge.f32.partialorder %v339, 0.0
    %vm346 = vcmp.ge.f32.partialorder %v342, 0.0
    %v347 = vstv %s108
    %v348 = vmul.f32 %v347, %v339
    %v349 = vmul.f32 %v347, %v342
    %v350 = vsel %vm345, %v339, %v348
    %v351 = vsel %vm346, %v342, %v349
    %v352 = vpack.c.bf16 %v351, %v350
    %v353 = vld [vmem:[#allocation10] sm:$0xf]
    %v354 = vld [vmem:[#allocation10 + $0x4] sm:$0xf]
    %v355 = vld [vmem:[#allocation10 + $0x8] sm:$0xf]
    %v356 = vld [vmem:[#allocation10 + $0xc] sm:$0xf]
    %v357 = vld [vmem:[#allocation10 + $0x10] sm:$0xf]
    %v358 = vld [vmem:[#allocation10 + $0x14] sm:$0xf]
    %v359 = vld [vmem:[#allocation10 + $0x18] sm:$0xf]
    %v360 = vld [vmem:[#allocation10 + $0x1c] sm:$0xf]
    %v361 = vld [vmem:[#allocation10 + $0x20] sm:$0xf]
    %v362 = vld [vmem:[#allocation10 + $0x24] sm:$0xf]
    %v363 = vld [vmem:[#allocation10 + $0x28] sm:$0xf]
    %v364 = vld [vmem:[#allocation10 + $0x2c] sm:$0xf]
    %v365 = vld [vmem:[#allocation10 + $0x30] sm:$0xf]
    %v366 = vld [vmem:[#allocation10 + $0x34] sm:$0xf]
    %v367 = vld [vmem:[#allocation10 + $0x38] sm:$0xf]
    %v368 = vld [vmem:[#allocation10 + $0x3c] sm:$0xf]
    %v369 = vld [vmem:[%s7] sm:$0x1]
    %v371 = vlaneseq
    %v372 = vshrl.u32 %v371, 7
    %v373 = vsub.s32 0, %v372
    %v374 = vrot.slane %v369, %v373
    %v392 = vunpack.c.l.b16 %v353
    %v393 = vunpack.c.l.b16 %v354
    %v394 = vunpack.c.l.b16 %v355
    %v395 = vunpack.c.l.b16 %v356
    %v396 = vunpack.c.l.b16 %v357
    %v397 = vunpack.c.l.b16 %v358
    %v398 = vunpack.c.l.b16 %v359
    %v399 = vunpack.c.l.b16 %v360
    %v400 = vunpack.c.l.b16 %v361
    %v401 = vunpack.c.l.b16 %v362
    %v402 = vunpack.c.l.b16 %v363
    %v403 = vunpack.c.l.b16 %v364
    %v404 = vunpack.c.l.b16 %v365
    %v405 = vunpack.c.l.b16 %v366
    %v406 = vunpack.c.l.b16 %v367
    %v407 = vunpack.c.l.b16 %v368
    %v408 = vpack.c.b16 %v393, %v392
    %v409 = vpack.c.b16 %v395, %v394
    %v410 = vpack.c.b16 %v397, %v396
    %v411 = vpack.c.b16 %v399, %v398
    %v412 = vpack.c.b16 %v401, %v400
    %v413 = vpack.c.b16 %v403, %v402
    %v414 = vpack.c.b16 %v405, %v404
    %v415 = vpack.c.b16 %v407, %v406
    %424 = vmatprep.subr.bf16.mxu0 0
    %425 = vmatpush1.bf16.msra.mxu0 %v408
    %426 = vmatprep.subr.bf16.mxu0 0
    %427 = vmatpush1.bf16.msra.mxu0 %v409
    %428 = vmatprep.subr.bf16.mxu0 0
    %429 = vmatpush1.bf16.msra.mxu0 %v410
    %430 = vmatprep.subr.bf16.mxu0 0
    %431 = vmatpush1.bf16.msra.mxu0 %v411
    %432 = vmatprep.subr.bf16.mxu0 0
    %433 = vmatpush1.bf16.msra.mxu0 %v412
    %434 = vmatprep.subr.bf16.mxu0 0
    %435 = vmatpush1.bf16.msra.mxu0 %v413
    %436 = vmatprep.subr.bf16.mxu0 0
    %437 = vmatpush1.bf16.msra.mxu0 %v414
    %438 = vmatprep.subr.bf16.mxu0 0
    %439 = vmatpush1.bf16.msra.mxu0 %v415
    %440 = vmatprep.subr.bf16.mxu0 0
    %441 = vmatpush1.bf16.msra.mxu0 0
    %442 = vmatprep.subr.bf16.mxu0 0
    %443 = vmatpush1.bf16.msra.mxu0 0
    %444 = vmatprep.subr.bf16.mxu0 0
    %445 = vmatpush1.bf16.msra.mxu0 0
    %446 = vmatprep.subr.bf16.mxu0 0
    %447 = vmatpush1.bf16.msra.mxu0 0
    %448 = vmatprep.subr.bf16.mxu0 0
    %449 = vmatpush1.bf16.msra.mxu0 0
    %450 = vmatprep.subr.bf16.mxu0 0
    %451 = vmatpush1.bf16.msra.mxu0 0
    %452 = vmatprep.subr.bf16.mxu0 0
    %453 = vmatpush1.bf16.msra.mxu0 0
    %454 = vmatprep.subr.bf16.mxu0 0
    %455 = vmatpush1.bf16.msra.mxu0 0
    %456 = vmatprep.mubr.bf16.mxu0 0
    %457 = vmatmul.mubr.bf16.gmra.mrb[0].mxu0 %v352
    %v458 = vpop.f32.mrb[0].mxu0
    %v459 = vadd.f32 %v374, %v458
    %v460 = vpop.f32.mrb[0].mxu0
    %v461 = vpop.f32.mrb[0].mxu0
    %v462 = vadd.f32 %v374, %v461
    %v463 = vpop.f32.mrb[0].mxu0
    %464 = vdwg.mxu0
    %vm465 = vcmp.ge.f32.partialorder %v459, 0.0
    %vm466 = vcmp.ge.f32.partialorder %v462, 0.0
    %v467 = vstv %s109
    %v468 = vmul.f32 %v467, %v459
    %v469 = vmul.f32 %v467, %v462
    %v470 = vsel %vm465, %v459, %v468
    %v471 = vsel %vm466, %v462, %v469
    %v472 = vld [vmem:[#allocation12] sm:$0xf]
    %v473 = vld [vmem:[#allocation12 + $0x4] sm:$0xf]
    %v474 = vld [vmem:[#allocation12 + $0x8] sm:$0xf]
    %v475 = vld [vmem:[#allocation12 + $0xc] sm:$0xf]
    %v476 = vld [vmem:[#allocation12 + $0x10] sm:$0xf]
    %v477 = vld [vmem:[#allocation12 + $0x14] sm:$0xf]
    %v478 = vld [vmem:[#allocation12 + $0x18] sm:$0xf]
    %v479 = vld [vmem:[#allocation12 + $0x1c] sm:$0xf]
    %v480 = vld [vmem:[#allocation12 + $0x20] sm:$0xf]
    %v481 = vld [vmem:[#allocation12 + $0x24] sm:$0xf]
    %v482 = vld [vmem:[#allocation12 + $0x28] sm:$0xf]
    %v483 = vld [vmem:[#allocation12 + $0x2c] sm:$0xf]
    %v484 = vld [vmem:[#allocation12 + $0x30] sm:$0xf]
    %v485 = vld [vmem:[#allocation12 + $0x34] sm:$0xf]
    %v486 = vld [vmem:[#allocation12 + $0x38] sm:$0xf]
    %v487 = vld [vmem:[#allocation12 + $0x3c] sm:$0xf]
    %v488 = vld [vmem:[%s9] sm:$0x1]
    %v490 = vlaneseq
    %v491 = vshrl.u32 %v490, 7
    %v492 = vsub.s32 0, %v491
    %v493 = vrot.slane %v488, %v492
    %v511 = vunpack.c.l.b16 %v472
    %v512 = vunpack.c.l.b16 %v473
    %v513 = vunpack.c.l.b16 %v474
    %v514 = vunpack.c.l.b16 %v475
    %v515 = vunpack.c.l.b16 %v476
    %v516 = vunpack.c.l.b16 %v477
    %v517 = vunpack.c.l.b16 %v478
    %v518 = vunpack.c.l.b16 %v479
    %v519 = vunpack.c.l.b16 %v480
    %v520 = vunpack.c.l.b16 %v481
    %v521 = vunpack.c.l.b16 %v482
    %v522 = vunpack.c.l.b16 %v483
    %v523 = vunpack.c.l.b16 %v484
    %v524 = vunpack.c.l.b16 %v485
    %v525 = vunpack.c.l.b16 %v486
    %v526 = vunpack.c.l.b16 %v487
    %v527 = vpack.c.b16 %v512, %v511
    %v528 = vpack.c.b16 %v514, %v513
    %v529 = vpack.c.b16 %v516, %v515
    %v530 = vpack.c.b16 %v518, %v517
    %v531 = vpack.c.b16 %v520, %v519
    %v532 = vpack.c.b16 %v522, %v521
    %v533 = vpack.c.b16 %v524, %v523
    %v534 = vpack.c.b16 %v526, %v525
    %543 = vmatprep.subr.bf16.mxu0 0
    %544 = vmatpush1.bf16.msra.mxu0 %v527
    %545 = vmatprep.subr.bf16.mxu0 0
    %546 = vmatpush1.bf16.msra.mxu0 %v528
    %547 = vmatprep.subr.bf16.mxu0 0
    %548 = vmatpush1.bf16.msra.mxu0 %v529
    %549 = vmatprep.subr.bf16.mxu0 0
    %550 = vmatpush1.bf16.msra.mxu0 %v530
    %551 = vmatprep.subr.bf16.mxu0 0
    %552 = vmatpush1.bf16.msra.mxu0 %v531
    %553 = vmatprep.subr.bf16.mxu0 0
    %554 = vmatpush1.bf16.msra.mxu0 %v532
    %555 = vmatprep.subr.bf16.mxu0 0
    %556 = vmatpush1.bf16.msra.mxu0 %v533
    %557 = vmatprep.subr.bf16.mxu0 0
    %558 = vmatpush1.bf16.msra.mxu0 %v534
    %559 = vmatprep.subr.bf16.mxu0 0
    %560 = vmatpush1.bf16.msra.mxu0 0
    %561 = vmatprep.subr.bf16.mxu0 0
    %562 = vmatpush1.bf16.msra.mxu0 0
    %563 = vmatprep.subr.bf16.mxu0 0
    %564 = vmatpush1.bf16.msra.mxu0 0
    %565 = vmatprep.subr.bf16.mxu0 0
    %566 = vmatpush1.bf16.msra.mxu0 0
    %567 = vmatprep.subr.bf16.mxu0 0
    %568 = vmatpush1.bf16.msra.mxu0 0
    %569 = vmatprep.subr.bf16.mxu0 0
    %570 = vmatpush1.bf16.msra.mxu0 0
    %571 = vmatprep.subr.bf16.mxu0 0
    %572 = vmatpush1.bf16.msra.mxu0 0
    %573 = vmatprep.subr.bf16.mxu0 0
    %574 = vmatpush1.bf16.msra.mxu0 0
    %575 = vmatprep.mubr.bf16.mxu0 0
    %576 = vmatmul.mubr.bf16.gmra.mrb[0].mxu0 %v112
    %v577 = vpop.f32.mrb[0].mxu0
    %v578 = vadd.f32 %v493, %v577
    %v579 = vpop.f32.mrb[0].mxu0
    %v580 = vpop.f32.mrb[0].mxu0
    %v581 = vadd.f32 %v493, %v580
    %v582 = vpop.f32.mrb[0].mxu0
    %583 = vdwg.mxu0
    %v584 = vadd.f32 %v470, %v578
    %v585 = vadd.f32 %v471, %v581
    %586 = vst [vmem:[#allocation13] sm:$0xff] %v584
    %587 = vst [vmem:[#allocation13 + $0x8] sm:$0xff] %v585
    // Predicated region
    $region58: #{tpu_custom_call.1} parent=1 // pred_check
      _
    $region59: #{tpu_custom_call.1} parent=1 // pred_check_branch
      %589 = sbr.rel (0) target = $region61
    $region60: #{tpu_custom_call.1} parent=1 // pred_region
      %s591 = ssub.s32 256, 256
      %592 = vsyncadd [#allocation6], %s591
      %s593 = sshll.u32 [#allocation13], 4
      %s594 = int_to_ptr.vmem [resolvable:$true] %s593
      %599 = dma.vmem_to_hbm [thread:$0]  %s594, 256, %s10, [#allocation6], 128, 128, 8
    $region61: #{tpu_custom_call.1} parent=1 // pred_fallthru
      _
    // Predicated region
    $region62: #{tpu_custom_call.1} parent=1 // pred_check
      _
    $region63: #{tpu_custom_call.1} parent=1 // pred_check_branch
      %601 = sbr.rel (0) target = $region65
    $region64: #{tpu_custom_call.1} parent=1 // pred_region
      %602 = dma.done [#allocation6], 256
    $region65: #{tpu_custom_call.1} parent=1 // pred_fallthru
      _
    %603 = vsyncpa [#allocation5], 1
    %604 = vsyncpa [#allocation8], 1
    %605 = vsyncpa [#allocation11], 1
    %606 = vsyncpa [#allocation6], 1

// kernel: tpu_custom_call.1
$region0: #{tpu_custom_call.1}
  #allocation0 [shape = 'u32[]', space=smem, size = 0x4, offset = 0x4, fixed_abs, tag = 'smem constant byte address 0x4 - core index']
  #allocation1 [shape = 'u32[144,128]{1,0:T(1,128)}', space=vmem, size = 0x12000, scoped, tag = 'internal scratch']
  #allocation2 [shape = 's32[1]{0}', space=sflag, size = 0x4, scoped, tag = 'scoped memory for tpu_custom_call.1']
  #allocation3 [shape = 'u8[512]{0}', space=smem, size = 0x200, scoped, tag = 'prefetched SMEM operand 0']
  %s0 = inlined_call_operand.hbm [shape: f32[3], index: 0, kind: input, shape index: {}]
  %s1 = inlined_call_operand.hbm [shape: f32[16,128], index: 1, kind: input, shape index: {}]
  %s2 = inlined_call_operand.hbm [shape: bf16[128,128], index: 2, kind: input, shape index: {}]
  %s3 = inlined_call_operand.vmem [shape: f32[1,128], index: 3, kind: input, shape index: {}]
  %s4 = inlined_call_operand.hbm [shape: bf16[128,128], index: 4, kind: input, shape index: {}]
  %s5 = inlined_call_operand.vmem [shape: f32[1,128], index: 5, kind: input, shape index: {}]
  %s6 = inlined_call_operand.hbm [shape: bf16[128,128], index: 6, kind: input, shape index: {}]
  %s7 = inlined_call_operand.vmem [shape: f32[1,128], index: 7, kind: input, shape index: {}]
  %s8 = inlined_call_operand.hbm [shape: bf16[128,128], index: 8, kind: input, shape index: {}]
  %s9 = inlined_call_operand.vmem [shape: f32[1,128], index: 9, kind: input, shape index: {}]
  %s10 = inlined_call_operand.hbm [shape: f32[16,128], index: 10, kind: output, shape index: {}]
  %s11 = sld [smem:[#allocation0]]
  $region66: #{tpu_custom_call.1} parent=0
    _
  %s13 = ssub.s32 1, %s11
  %s14 = scalar_select 0, %s13, %s11
  %16 = dma.hbm_to_smem %s0, 16, [#allocation3], [#allocation2]
  %17 = dma.done [#allocation2], 16
  %18 = sfence
  $region1: #{tpu_custom_call.1} parent=0
    #allocation4 [shape = 'u8[8192]{0}', space=vmem, size = 0x2000, scoped, tag = 'input window, operand 1, single buffered']
    #allocation5 [shape = 's32[1]{0}', space=sflag, size = 0x4, scoped, tag = 'scoped memory for tpu_custom_call.1']
    #allocation6 [shape = 's32[1]{0}', space=sflag, size = 0x4, scoped, tag = 'scoped memory for tpu_custom_call.1']
    #allocation7 [shape = 'u8[32768]{0}', space=vmem, size = 0x8000, scoped, tag = 'input window, operand 2, single buffered']
    #allocation8 [shape = 's32[1]{0}', space=sflag, size = 0x4, scoped, tag = 'scoped memory for tpu_custom_call.1']
    #allocation9 [shape = 'u8[32768]{0}', space=vmem, size = 0x8000, scoped, tag = 'input window, operand 4, single buffered']
    #allocation10 [shape = 'u8[32768]{0}', space=vmem, size = 0x8000, scoped, tag = 'input window, operand 6, single buffered']
    #allocation11 [shape = 's32[1]{0}', space=sflag, size = 0x4, scoped, tag = 'scoped memory for tpu_custom_call.1']
    #allocation12 [shape = 'u8[32768]{0}', space=vmem, size = 0x8000, scoped, tag = 'input window, operand 8, single buffered']
    #allocation13 [shape = 'u8[8192]{0}', space=vmem, size = 0x2000, scoped, tag = 'output window, operand 0, single buffered']
    %19 = vsyncpa [#allocation5], 0
    %20 = vsyncpa [#allocation8], 0
    %21 = vsyncpa [#allocation11], 0
    %22 = vsyncpa [#allocation6], 0
    // Predicated region
    $region2: #{tpu_custom_call.1} parent=1 // pred_check
      _
    $region3: #{tpu_custom_call.1} parent=1 // pred_check_branch
      %24 = sbr.rel (0) target = $region5
    $region4: #{tpu_custom_call.1} parent=1 // pred_region
      %s26 = ssub.s32 256, 256
      %27 = vsyncadd [#allocation5], %s26
      %s28 = sshll.u32 [#allocation4], 4
      %s29 = int_to_ptr.vmem [resolvable:$true] %s28
      %34 = dma.hbm_to_vmem [thread:$0]  %s1, 256, %s29, [#allocation5], 128, 128, 8
    $region5: #{tpu_custom_call.1} parent=1 // pred_fallthru
      _
    // Predicated region
    $region6: #{tpu_custom_call.1} parent=1 // pred_check
      _
    $region7: #{tpu_custom_call.1} parent=1 // pred_check_branch
      %36 = sbr.rel (0) target = $region9
    $region8: #{tpu_custom_call.1} parent=1 // pred_region
      %s38 = ssub.s32 1024, 1024
      %39 = vsyncadd [#allocation8], %s38
      %s40 = sshll.u32 [#allocation7], 4
      %s41 = int_to_ptr.vmem [resolvable:$true] %s40
      %46 = dma.hbm_to_vmem [thread:$0]  %s2, 1024, %s41, [#allocation8], 64, 64, 4
    $region9: #{tpu_custom_call.1} parent=1 // pred_fallthru
      _
    // Predicated region
    $region10: #{tpu_custom_call.1} parent=1 // pred_check
      _
    $region11: #{tpu_custom_call.1} parent=1 // pred_check_branch
      %48 = sbr.rel (0) target = $region13
    $region12: #{tpu_custom_call.1} parent=1 // pred_region
      _
    $region13: #{tpu_custom_call.1} parent=1 // pred_fallthru
      _
    // Predicated region
    $region14: #{tpu_custom_call.1} parent=1 // pred_check
      _
    $region15: #{tpu_custom_call.1} parent=1 // pred_check_branch
      %50 = sbr.rel (0) target = $region17
    $region16: #{tpu_custom_call.1} parent=1 // pred_region
      %s52 = ssub.s32 1024, 1024
      %53 = vsyncadd [#allocation8], %s52
      %s54 = sshll.u32 [#allocation9], 4
      %s55 = int_to_ptr.vmem [resolvable:$true] %s54
      %60 = dma.hbm_to_vmem [thread:$0]  %s4, 1024, %s55, [#allocation8], 64, 64, 4
    $region17: #{tpu_custom_call.1} parent=1 // pred_fallthru
      _
    // Predicated region
    $region18: #{tpu_custom_call.1} parent=1 // pred_check
      _
    $region19: #{tpu_custom_call.1} parent=1 // pred_check_branch
      %62 = sbr.rel (0) target = $region21
    $region20: #{tpu_custom_call.1} parent=1 // pred_region
      _
    $region21: #{tpu_custom_call.1} parent=1 // pred_fallthru
      _
    // Predicated region
    $region22: #{tpu_custom_call.1} parent=1 // pred_check
      _
    $region23: #{tpu_custom_call.1} parent=1 // pred_check_branch
      %64 = sbr.rel (0) target = $region25
    $region24: #{tpu_custom_call.1} parent=1 // pred_region
      %s66 = ssub.s32 1024, 1024
      %67 = vsyncadd [#allocation11], %s66
      %s68 = sshll.u32 [#allocation10], 4
      %s69 = int_to_ptr.vmem [resolvable:$true] %s68
      %74 = dma.hbm_to_vmem [thread:$0]  %s6, 1024, %s69, [#allocation11], 64, 64, 4
    $region25: #{tpu_custom_call.1} parent=1 // pred_fallthru
      _
    // Predicated region
    $region26: #{tpu_custom_call.1} parent=1 // pred_check
      _
    $region27: #{tpu_custom_call.1} parent=1 // pred_check_branch
      %76 = sbr.rel (0) target = $region29
    $region28: #{tpu_custom_call.1} parent=1 // pred_region
      _
    $region29: #{tpu_custom_call.1} parent=1 // pred_fallthru
      _
    // Predicated region
    $region30: #{tpu_custom_call.1} parent=1 // pred_check
      _
    $region31: #{tpu_custom_call.1} parent=1 // pred_check_branch
      %78 = sbr.rel (0) target = $region33
    $region32: #{tpu_custom_call.1} parent=1 // pred_region
      %s80 = ssub.s32 1024, 1024
      %81 = vsyncadd [#allocation11], %s80
      %s82 = sshll.u32 [#allocation12], 4
      %s83 = int_to_ptr.vmem [resolvable:$true] %s82
      %88 = dma.hbm_to_vmem [thread:$0]  %s8, 1024, %s83, [#allocation11], 64, 64, 4
    $region33: #{tpu_custom_call.1} parent=1 // pred_fallthru
      _
    // Predicated region
    $region34: #{tpu_custom_call.1} parent=1 // pred_check
      _
    $region35: #{tpu_custom_call.1} parent=1 // pred_check_branch
      %90 = sbr.rel (0) target = $region37
    $region36: #{tpu_custom_call.1} parent=1 // pred_region
      _
    $region37: #{tpu_custom_call.1} parent=1 // pred_fallthru
      _
    // Predicated region
    $region38: #{tpu_custom_call.1} parent=1 // pred_check
      _
    $region39: #{tpu_custom_call.1} parent=1 // pred_check_branch
      %92 = sbr.rel (0) target = $region41
    $region40: #{tpu_custom_call.1} parent=1 // pred_region
      %93 = dma.done [#allocation5], 256
    $region41: #{tpu_custom_call.1} parent=1 // pred_fallthru
      _
    // Predicated region
    $region42: #{tpu_custom_call.1} parent=1 // pred_check
      _
    $region43: #{tpu_custom_call.1} parent=1 // pred_check_branch
      %95 = sbr.rel (0) target = $region45
    $region44: #{tpu_custom_call.1} parent=1 // pred_region
      %96 = dma.done [#allocation8], 1024
    $region45: #{tpu_custom_call.1} parent=1 // pred_fallthru
      _
    // Predicated region
    $region46: #{tpu_custom_call.1} parent=1 // pred_check
      _
    $region47: #{tpu_custom_call.1} parent=1 // pred_check_branch
      %98 = sbr.rel (0) target = $region49
    $region48: #{tpu_custom_call.1} parent=1 // pred_region
      %99 = dma.done [#allocation8], 1024
    $region49: #{tpu_custom_call.1} parent=1 // pred_fallthru
      _
    // Predicated region
    $region50: #{tpu_custom_call.1} parent=1 // pred_check
      _
    $region51: #{tpu_custom_call.1} parent=1 // pred_check_branch
      %101 = sbr.rel (0) target = $region53
    $region52: #{tpu_custom_call.1} parent=1 // pred_region
      %102 = dma.done [#allocation11], 1024
    $region53: #{tpu_custom_call.1} parent=1 // pred_fallthru
      _
    // Predicated region
    $region54: #{tpu_custom_call.1} parent=1 // pred_check
      _
    $region55: #{tpu_custom_call.1} parent=1 // pred_check_branch
      %104 = sbr.rel (0) target = $region57
    $region56: #{tpu_custom_call.1} parent=1 // pred_region
      %105 = dma.done [#allocation11], 1024
    $region57: #{tpu_custom_call.1} parent=1 // pred_fallthru
      _
    %s107 = sld [smem:[#allocation3]]
    %s108 = sld [smem:[#allocation3 + $0x1]]
    %s109 = sld [smem:[#allocation3 + $0x2]]
    %v110 = vld [vmem:[#allocation4] sm:$0xff]
    %v111 = vld [vmem:[#allocation4 + $0x8] sm:$0xff]
    %v112 = vpack.c.bf16 %v111, %v110
    %v113 = vld [vmem:[#allocation7] sm:$0xf]
    %v114 = vld [vmem:[#allocation7 + $0x4] sm:$0xf]
    %v115 = vld [vmem:[#allocation7 + $0x8] sm:$0xf]
    %v116 = vld [vmem:[#allocation7 + $0xc] sm:$0xf]
    %v117 = vld [vmem:[#allocation7 + $0x10] sm:$0xf]
    %v118 = vld [vmem:[#allocation7 + $0x14] sm:$0xf]
    %v119 = vld [vmem:[#allocation7 + $0x18] sm:$0xf]
    %v120 = vld [vmem:[#allocation7 + $0x1c] sm:$0xf]
    %v121 = vld [vmem:[#allocation7 + $0x20] sm:$0xf]
    %v122 = vld [vmem:[#allocation7 + $0x24] sm:$0xf]
    %v123 = vld [vmem:[#allocation7 + $0x28] sm:$0xf]
    %v124 = vld [vmem:[#allocation7 + $0x2c] sm:$0xf]
    %v125 = vld [vmem:[#allocation7 + $0x30] sm:$0xf]
    %v126 = vld [vmem:[#allocation7 + $0x34] sm:$0xf]
    %v127 = vld [vmem:[#allocation7 + $0x38] sm:$0xf]
    %v128 = vld [vmem:[#allocation7 + $0x3c] sm:$0xf]
    %v129 = vld [vmem:[%s3] sm:$0x1]
    %v131 = vlaneseq
    %v132 = vshrl.u32 %v131, 7
    %v133 = vsub.s32 0, %v132
    %v134 = vrot.slane %v129, %v133
    %v152 = vunpack.c.l.b16 %v113
    %v153 = vunpack.c.l.b16 %v114
    %v154 = vunpack.c.l.b16 %v115
    %v155 = vunpack.c.l.b16 %v116
    %v156 = vunpack.c.l.b16 %v117
    %v157 = vunpack.c.l.b16 %v118
    %v158 = vunpack.c.l.b16 %v119
    %v159 = vunpack.c.l.b16 %v120
    %v160 = vunpack.c.l.b16 %v121
    %v161 = vunpack.c.l.b16 %v122
    %v162 = vunpack.c.l.b16 %v123
    %v163 = vunpack.c.l.b16 %v124
    %v164 = vunpack.c.l.b16 %v125
    %v165 = vunpack.c.l.b16 %v126
    %v166 = vunpack.c.l.b16 %v127
    %v167 = vunpack.c.l.b16 %v128
    %v168 = vpack.c.b16 %v153, %v152
    %v169 = vpack.c.b16 %v155, %v154
    %v170 = vpack.c.b16 %v157, %v156
    %v171 = vpack.c.b16 %v159, %v158
    %v172 = vpack.c.b16 %v161, %v160
    %v173 = vpack.c.b16 %v163, %v162
    %v174 = vpack.c.b16 %v165, %v164
    %v175 = vpack.c.b16 %v167, %v166
    %184 = vmatprep.subr.bf16.mxu0 0
    %185 = vmatpush1.bf16.msra.mxu0 %v168
    %186 = vmatprep.subr.bf16.mxu0 0
    %187 = vmatpush1.bf16.msra.mxu0 %v169
    %188 = vmatprep.subr.bf16.mxu0 0
    %189 = vmatpush1.bf16.msra.mxu0 %v170
    %190 = vmatprep.subr.bf16.mxu0 0
    %191 = vmatpush1.bf16.msra.mxu0 %v171
    %192 = vmatprep.subr.bf16.mxu0 0
    %193 = vmatpush1.bf16.msra.mxu0 %v172
    %194 = vmatprep.subr.bf16.mxu0 0
    %195 = vmatpush1.bf16.msra.mxu0 %v173
    %196 = vmatprep.subr.bf16.mxu0 0
    %197 = vmatpush1.bf16.msra.mxu0 %v174
    %198 = vmatprep.subr.bf16.mxu0 0
    %199 = vmatpush1.bf16.msra.mxu0 %v175
    %200 = vmatprep.subr.bf16.mxu0 0
    %201 = vmatpush1.bf16.msra.mxu0 0
    %202 = vmatprep.subr.bf16.mxu0 0
    %203 = vmatpush1.bf16.msra.mxu0 0
    %204 = vmatprep.subr.bf16.mxu0 0
    %205 = vmatpush1.bf16.msra.mxu0 0
    %206 = vmatprep.subr.bf16.mxu0 0
    %207 = vmatpush1.bf16.msra.mxu0 0
    %208 = vmatprep.subr.bf16.mxu0 0
    %209 = vmatpush1.bf16.msra.mxu0 0
    %210 = vmatprep.subr.bf16.mxu0 0
    %211 = vmatpush1.bf16.msra.mxu0 0
    %212 = vmatprep.subr.bf16.mxu0 0
    %213 = vmatpush1.bf16.msra.mxu0 0
    %214 = vmatprep.subr.bf16.mxu0 0
    %215 = vmatpush1.bf16.msra.mxu0 0
    %216 = vmatprep.mubr.bf16.mxu0 0
    %217 = vmatmul.mubr.bf16.gmra.mrb[0].mxu0 %v112
    %v218 = vpop.f32.mrb[0].mxu0
    %v219 = vadd.f32 %v134, %v218
    %v220 = vpop.f32.mrb[0].mxu0
    %v221 = vpop.f32.mrb[0].mxu0
    %v222 = vadd.f32 %v134, %v221
    %v223 = vpop.f32.mrb[0].mxu0
    %224 = vdwg.mxu0
    %vm225 = vcmp.ge.f32.partialorder %v219, 0.0
    %vm226 = vcmp.ge.f32.partialorder %v222, 0.0
    %v227 = vstv %s107
    %v228 = vmul.f32 %v227, %v219
    %v229 = vmul.f32 %v227, %v222
    %v230 = vsel %vm225, %v219, %v228
    %v231 = vsel %vm226, %v222, %v229
    %v232 = vpack.c.bf16 %v231, %v230
    %v233 = vld [vmem:[#allocation9] sm:$0xf]
    %v234 = vld [vmem:[#allocation9 + $0x4] sm:$0xf]
    %v235 = vld [vmem:[#allocation9 + $0x8] sm:$0xf]
    %v236 = vld [vmem:[#allocation9 + $0xc] sm:$0xf]
    %v237 = vld [vmem:[#allocation9 + $0x10] sm:$0xf]
    %v238 = vld [vmem:[#allocation9 + $0x14] sm:$0xf]
    %v239 = vld [vmem:[#allocation9 + $0x18] sm:$0xf]
    %v240 = vld [vmem:[#allocation9 + $0x1c] sm:$0xf]
    %v241 = vld [vmem:[#allocation9 + $0x20] sm:$0xf]
    %v242 = vld [vmem:[#allocation9 + $0x24] sm:$0xf]
    %v243 = vld [vmem:[#allocation9 + $0x28] sm:$0xf]
    %v244 = vld [vmem:[#allocation9 + $0x2c] sm:$0xf]
    %v245 = vld [vmem:[#allocation9 + $0x30] sm:$0xf]
    %v246 = vld [vmem:[#allocation9 + $0x34] sm:$0xf]
    %v247 = vld [vmem:[#allocation9 + $0x38] sm:$0xf]
    %v248 = vld [vmem:[#allocation9 + $0x3c] sm:$0xf]
    %v249 = vld [vmem:[%s5] sm:$0x1]
    %v251 = vlaneseq
    %v252 = vshrl.u32 %v251, 7
    %v253 = vsub.s32 0, %v252
    %v254 = vrot.slane %v249, %v253
    %v272 = vunpack.c.l.b16 %v233
    %v273 = vunpack.c.l.b16 %v234
    %v274 = vunpack.c.l.b16 %v235
    %v275 = vunpack.c.l.b16 %v236
    %v276 = vunpack.c.l.b16 %v237
    %v277 = vunpack.c.l.b16 %v238
    %v278 = vunpack.c.l.b16 %v239
    %v279 = vunpack.c.l.b16 %v240
    %v280 = vunpack.c.l.b16 %v241
    %v281 = vunpack.c.l.b16 %v242
    %v282 = vunpack.c.l.b16 %v243
    %v283 = vunpack.c.l.b16 %v244
    %v284 = vunpack.c.l.b16 %v245
    %v285 = vunpack.c.l.b16 %v246
    %v286 = vunpack.c.l.b16 %v247
    %v287 = vunpack.c.l.b16 %v248
    %v288 = vpack.c.b16 %v273, %v272
    %v289 = vpack.c.b16 %v275, %v274
    %v290 = vpack.c.b16 %v277, %v276
    %v291 = vpack.c.b16 %v279, %v278
    %v292 = vpack.c.b16 %v281, %v280
    %v293 = vpack.c.b16 %v283, %v282
    %v294 = vpack.c.b16 %v285, %v284
    %v295 = vpack.c.b16 %v287, %v286
    %304 = vmatprep.subr.bf16.mxu0 0
    %305 = vmatpush1.bf16.msra.mxu0 %v288
    %306 = vmatprep.subr.bf16.mxu0 0
    %307 = vmatpush1.bf16.msra.mxu0 %v289
    %308 = vmatprep.subr.bf16.mxu0 0
    %309 = vmatpush1.bf16.msra.mxu0 %v290
    %310 = vmatprep.subr.bf16.mxu0 0
    %311 = vmatpush1.bf16.msra.mxu0 %v291
    %312 = vmatprep.subr.bf16.mxu0 0
    %313 = vmatpush1.bf16.msra.mxu0 %v292
    %314 = vmatprep.subr.bf16.mxu0 0
    %315 = vmatpush1.bf16.msra.mxu0 %v293
    %316 = vmatprep.subr.bf16.mxu0 0
    %317 = vmatpush1.bf16.msra.mxu0 %v294
    %318 = vmatprep.subr.bf16.mxu0 0
    %319 = vmatpush1.bf16.msra.mxu0 %v295
    %320 = vmatprep.subr.bf16.mxu0 0
    %321 = vmatpush1.bf16.msra.mxu0 0
    %322 = vmatprep.subr.bf16.mxu0 0
    %323 = vmatpush1.bf16.msra.mxu0 0
    %324 = vmatprep.subr.bf16.mxu0 0
    %325 = vmatpush1.bf16.msra.mxu0 0
    %326 = vmatprep.subr.bf16.mxu0 0
    %327 = vmatpush1.bf16.msra.mxu0 0
    %328 = vmatprep.subr.bf16.mxu0 0
    %329 = vmatpush1.bf16.msra.mxu0 0
    %330 = vmatprep.subr.bf16.mxu0 0
    %331 = vmatpush1.bf16.msra.mxu0 0
    %332 = vmatprep.subr.bf16.mxu0 0
    %333 = vmatpush1.bf16.msra.mxu0 0
    %334 = vmatprep.subr.bf16.mxu0 0
    %335 = vmatpush1.bf16.msra.mxu0 0
    %336 = vmatprep.mubr.bf16.mxu0 0
    %337 = vmatmul.mubr.bf16.gmra.mrb[0].mxu0 %v232
    %v338 = vpop.f32.mrb[0].mxu0
    %v339 = vadd.f32 %v254, %v338
    %v340 = vpop.f32.mrb[0].mxu0
    %v341 = vpop.f32.mrb[0].mxu0
    %v342 = vadd.f32 %v254, %v341
    %v343 = vpop.f32.mrb[0].mxu0
    %344 = vdwg.mxu0
    %vm345 = vcmp.ge.f32.partialorder %v339, 0.0
    %vm346 = vcmp.ge.f32.partialorder %v342, 0.0
    %v347 = vstv %s108
    %v348 = vmul.f32 %v347, %v339
    %v349 = vmul.f32 %v347, %v342
    %v350 = vsel %vm345, %v339, %v348
    %v351 = vsel %vm346, %v342, %v349
    %v352 = vpack.c.bf16 %v351, %v350
    %v353 = vld [vmem:[#allocation10] sm:$0xf]
    %v354 = vld [vmem:[#allocation10 + $0x4] sm:$0xf]
    %v355 = vld [vmem:[#allocation10 + $0x8] sm:$0xf]
    %v356 = vld [vmem:[#allocation10 + $0xc] sm:$0xf]
    %v357 = vld [vmem:[#allocation10 + $0x10] sm:$0xf]
    %v358 = vld [vmem:[#allocation10 + $0x14] sm:$0xf]
    %v359 = vld [vmem:[#allocation10 + $0x18] sm:$0xf]
    %v360 = vld [vmem:[#allocation10 + $0x1c] sm:$0xf]
    %v361 = vld [vmem:[#allocation10 + $0x20] sm:$0xf]
    %v362 = vld [vmem:[#allocation10 + $0x24] sm:$0xf]
    %v363 = vld [vmem:[#allocation10 + $0x28] sm:$0xf]
    %v364 = vld [vmem:[#allocation10 + $0x2c] sm:$0xf]
    %v365 = vld [vmem:[#allocation10 + $0x30] sm:$0xf]
    %v366 = vld [vmem:[#allocation10 + $0x34] sm:$0xf]
    %v367 = vld [vmem:[#allocation10 + $0x38] sm:$0xf]
    %v368 = vld [vmem:[#allocation10 + $0x3c] sm:$0xf]
    %v369 = vld [vmem:[%s7] sm:$0x1]
    %v371 = vlaneseq
    %v372 = vshrl.u32 %v371, 7
    %v373 = vsub.s32 0, %v372
    %v374 = vrot.slane %v369, %v373
    %v392 = vunpack.c.l.b16 %v353
    %v393 = vunpack.c.l.b16 %v354
    %v394 = vunpack.c.l.b16 %v355
    %v395 = vunpack.c.l.b16 %v356
    %v396 = vunpack.c.l.b16 %v357
    %v397 = vunpack.c.l.b16 %v358
    %v398 = vunpack.c.l.b16 %v359
    %v399 = vunpack.c.l.b16 %v360
    %v400 = vunpack.c.l.b16 %v361
    %v401 = vunpack.c.l.b16 %v362
    %v402 = vunpack.c.l.b16 %v363
    %v403 = vunpack.c.l.b16 %v364
    %v404 = vunpack.c.l.b16 %v365
    %v405 = vunpack.c.l.b16 %v366
    %v406 = vunpack.c.l.b16 %v367
    %v407 = vunpack.c.l.b16 %v368
    %v408 = vpack.c.b16 %v393, %v392
    %v409 = vpack.c.b16 %v395, %v394
    %v410 = vpack.c.b16 %v397, %v396
    %v411 = vpack.c.b16 %v399, %v398
    %v412 = vpack.c.b16 %v401, %v400
    %v413 = vpack.c.b16 %v403, %v402
    %v414 = vpack.c.b16 %v405, %v404
    %v415 = vpack.c.b16 %v407, %v406
    %424 = vmatprep.subr.bf16.mxu0 0
    %425 = vmatpush1.bf16.msra.mxu0 %v408
    %426 = vmatprep.subr.bf16.mxu0 0
    %427 = vmatpush1.bf16.msra.mxu0 %v409
    %428 = vmatprep.subr.bf16.mxu0 0
    %429 = vmatpush1.bf16.msra.mxu0 %v410
    %430 = vmatprep.subr.bf16.mxu0 0
    %431 = vmatpush1.bf16.msra.mxu0 %v411
    %432 = vmatprep.subr.bf16.mxu0 0
    %433 = vmatpush1.bf16.msra.mxu0 %v412
    %434 = vmatprep.subr.bf16.mxu0 0
    %435 = vmatpush1.bf16.msra.mxu0 %v413
    %436 = vmatprep.subr.bf16.mxu0 0
    %437 = vmatpush1.bf16.msra.mxu0 %v414
    %438 = vmatprep.subr.bf16.mxu0 0
    %439 = vmatpush1.bf16.msra.mxu0 %v415
    %440 = vmatprep.subr.bf16.mxu0 0
    %441 = vmatpush1.bf16.msra.mxu0 0
    %442 = vmatprep.subr.bf16.mxu0 0
    %443 = vmatpush1.bf16.msra.mxu0 0
    %444 = vmatprep.subr.bf16.mxu0 0
    %445 = vmatpush1.bf16.msra.mxu0 0
    %446 = vmatprep.subr.bf16.mxu0 0
    %447 = vmatpush1.bf16.msra.mxu0 0
    %448 = vmatprep.subr.bf16.mxu0 0
    %449 = vmatpush1.bf16.msra.mxu0 0
    %450 = vmatprep.subr.bf16.mxu0 0
    %451 = vmatpush1.bf16.msra.mxu0 0
    %452 = vmatprep.subr.bf16.mxu0 0
    %453 = vmatpush1.bf16.msra.mxu0 0
    %454 = vmatprep.subr.bf16.mxu0 0
    %455 = vmatpush1.bf16.msra.mxu0 0
    %456 = vmatprep.mubr.bf16.mxu0 0
    %457 = vmatmul.mubr.bf16.gmra.mrb[0].mxu0 %v352
    %v458 = vpop.f32.mrb[0].mxu0
    %v459 = vadd.f32 %v374, %v458
    %v460 = vpop.f32.mrb[0].mxu0
    %v461 = vpop.f32.mrb[0].mxu0
    %v462 = vadd.f32 %v374, %v461
    %v463 = vpop.f32.mrb[0].mxu0
    %464 = vdwg.mxu0
    %vm465 = vcmp.ge.f32.partialorder %v459, 0.0
    %vm466 = vcmp.ge.f32.partialorder %v462, 0.0
    %v467 = vstv %s109
    %v468 = vmul.f32 %v467, %v459
    %v469 = vmul.f32 %v467, %v462
    %v470 = vsel %vm465, %v459, %v468
    %v471 = vsel %vm466, %v462, %v469
    %v472 = vld [vmem:[#allocation12] sm:$0xf]
    %v473 = vld [vmem:[#allocation12 + $0x4] sm:$0xf]
    %v474 = vld [vmem:[#allocation12 + $0x8] sm:$0xf]
    %v475 = vld [vmem:[#allocation12 + $0xc] sm:$0xf]
    %v476 = vld [vmem:[#allocation12 + $0x10] sm:$0xf]
    %v477 = vld [vmem:[#allocation12 + $0x14] sm:$0xf]
    %v478 = vld [vmem:[#allocation12 + $0x18] sm:$0xf]
    %v479 = vld [vmem:[#allocation12 + $0x1c] sm:$0xf]
    %v480 = vld [vmem:[#allocation12 + $0x20] sm:$0xf]
    %v481 = vld [vmem:[#allocation12 + $0x24] sm:$0xf]
    %v482 = vld [vmem:[#allocation12 + $0x28] sm:$0xf]
    %v483 = vld [vmem:[#allocation12 + $0x2c] sm:$0xf]
    %v484 = vld [vmem:[#allocation12 + $0x30] sm:$0xf]
    %v485 = vld [vmem:[#allocation12 + $0x34] sm:$0xf]
    %v486 = vld [vmem:[#allocation12 + $0x38] sm:$0xf]
    %v487 = vld [vmem:[#allocation12 + $0x3c] sm:$0xf]
    %v488 = vld [vmem:[%s9] sm:$0x1]
    %v490 = vlaneseq
    %v491 = vshrl.u32 %v490, 7
    %v492 = vsub.s32 0, %v491
    %v493 = vrot.slane %v488, %v492
    %v511 = vunpack.c.l.b16 %v472
    %v512 = vunpack.c.l.b16 %v473
    %v513 = vunpack.c.l.b16 %v474
    %v514 = vunpack.c.l.b16 %v475
    %v515 = vunpack.c.l.b16 %v476
    %v516 = vunpack.c.l.b16 %v477
    %v517 = vunpack.c.l.b16 %v478
    %v518 = vunpack.c.l.b16 %v479
    %v519 = vunpack.c.l.b16 %v480
    %v520 = vunpack.c.l.b16 %v481
    %v521 = vunpack.c.l.b16 %v482
    %v522 = vunpack.c.l.b16 %v483
    %v523 = vunpack.c.l.b16 %v484
    %v524 = vunpack.c.l.b16 %v485
    %v525 = vunpack.c.l.b16 %v486
    %v526 = vunpack.c.l.b16 %v487
    %v527 = vpack.c.b16 %v512, %v511
    %v528 = vpack.c.b16 %v514, %v513
    %v529 = vpack.c.b16 %v516, %v515
    %v530 = vpack.c.b16 %v518, %v517
    %v531 = vpack.c.b16 %v520, %v519
    %v532 = vpack.c.b16 %v522, %v521
    %v533 = vpack.c.b16 %v524, %v523
    %v534 = vpack.c.b16 %v526, %v525
    %543 = vmatprep.subr.bf16.mxu0 0
    %544 = vmatpush1.bf16.msra.mxu0 %v527
    %545 = vmatprep.subr.bf16.mxu0 0
    %546 = vmatpush1.bf16.msra.mxu0 %v528
    %547 = vmatprep.subr.bf16.mxu0 0
    %548 = vmatpush1.bf16.msra.mxu0 %v529
    %549 = vmatprep.subr.bf16.mxu0 0
    %550 = vmatpush1.bf16.msra.mxu0 %v530
    %551 = vmatprep.subr.bf16.mxu0 0
    %552 = vmatpush1.bf16.msra.mxu0 %v531
    %553 = vmatprep.subr.bf16.mxu0 0
    %554 = vmatpush1.bf16.msra.mxu0 %v532
    %555 = vmatprep.subr.bf16.mxu0 0
    %556 = vmatpush1.bf16.msra.mxu0 %v533
    %557 = vmatprep.subr.bf16.mxu0 0
    %558 = vmatpush1.bf16.msra.mxu0 %v534
    %559 = vmatprep.subr.bf16.mxu0 0
    %560 = vmatpush1.bf16.msra.mxu0 0
    %561 = vmatprep.subr.bf16.mxu0 0
    %562 = vmatpush1.bf16.msra.mxu0 0
    %563 = vmatprep.subr.bf16.mxu0 0
    %564 = vmatpush1.bf16.msra.mxu0 0
    %565 = vmatprep.subr.bf16.mxu0 0
    %566 = vmatpush1.bf16.msra.mxu0 0
    %567 = vmatprep.subr.bf16.mxu0 0
    %568 = vmatpush1.bf16.msra.mxu0 0
    %569 = vmatprep.subr.bf16.mxu0 0
    %570 = vmatpush1.bf16.msra.mxu0 0
    %571 = vmatprep.subr.bf16.mxu0 0
    %572 = vmatpush1.bf16.msra.mxu0 0
    %573 = vmatprep.subr.bf16.mxu0 0
    %574 = vmatpush1.bf16.msra.mxu0 0
    %575 = vmatprep.mubr.bf16.mxu0 0
    %576 = vmatmul.mubr.bf16.gmra.mrb[0].mxu0 %v112
    %v577 = vpop.f32.mrb[0].mxu0
    %v578 = vadd.f32 %v493, %v577
    %v579 = vpop.f32.mrb[0].mxu0
    %v580 = vpop.f32.mrb[0].mxu0
    %v581 = vadd.f32 %v493, %v580
    %v582 = vpop.f32.mrb[0].mxu0
    %583 = vdwg.mxu0
    %v584 = vadd.f32 %v470, %v578
    %v585 = vadd.f32 %v471, %v581
    %586 = vst [vmem:[#allocation13] sm:$0xff] %v584
    %587 = vst [vmem:[#allocation13 + $0x8] sm:$0xff] %v585
    // Predicated region
    $region58: #{tpu_custom_call.1} parent=1 // pred_check
      _
    $region59: #{tpu_custom_call.1} parent=1 // pred_check_branch
      %589 = sbr.rel (0) target = $region61
    $region60: #{tpu_custom_call.1} parent=1 // pred_region
      %s591 = ssub.s32 256, 256
      %592 = vsyncadd [#allocation6], %s591
      %s593 = sshll.u32 [#allocation13], 4
      %s594 = int_to_ptr.vmem [resolvable:$true] %s593
      %599 = dma.vmem_to_hbm [thread:$0]  %s594, 256, %s10, [#allocation6], 128, 128, 8
    $region61: #{tpu_custom_call.1} parent=1 // pred_fallthru
      _
    // Predicated region
    $region62: #{tpu_custom_call.1} parent=1 // pred_check
      _
    $region63: #{tpu_custom_call.1} parent=1 // pred_check_branch
      %601 = sbr.rel (0) target = $region65
    $region64: #{tpu_custom_call.1} parent=1 // pred_region
      %602 = dma.done [#allocation6], 256
    $region65: #{tpu_custom_call.1} parent=1 // pred_fallthru
      _
    %603 = vsyncpa [#allocation5], 1
    %604 = vsyncpa [#allocation8], 1
    %605 = vsyncpa [#allocation11], 1
    %606 = vsyncpa [#allocation6], 1

</llo_original>
